<compile_context>
chip_gen: v7x
topology: tpu7x:2x2x1
jax: 0.10.0
libtpu: 0.0.40
codegen_flags: <defaults>
</compile_context>

<pallas_src>
import functools

import jax
import jax.numpy as jnp
from jax.experimental import pallas as pl
from jax.experimental.pallas import tpu as pltpu


# ---------------------------------------------------------------------------
# Fused kernel: one grid step = one batch element.
#   x_ref:     (N, C)      tokens for this batch element
#   wqkv_ref:  (C, 3C)     qkv weight (q columns pre-scaled by head_dim**-0.5)
#   wproj_ref: (C, C)      output projection weight
#   bproj_ref: (1, C)      output projection bias
#   o_ref:     (N, C)      output tokens for this batch element
# ---------------------------------------------------------------------------
def _fused_attn_kernel(x_ref, wqkv_ref, wproj_ref, bproj_ref, o_ref, *, num_heads):
    N, C = x_ref.shape
    hd = C // num_heads

    x = x_ref[...].astype(jnp.float32)                       # (N, C)
    # qkv projection for all heads at once (lane-dense, single MXU call).
    qkv = jnp.dot(x, wqkv_ref[...], preferred_element_type=jnp.float32)  # (N, 3C)

    # Accumulate the projected output head-by-head:
    #   concat_h(o_h) @ W_proj  ==  sum_h o_h @ W_proj[h*hd:(h+1)*hd, :]
    # This keeps every HBM/VMEM store lane-dense (no hd=4 minor dims materialized).
    acc = jnp.zeros((N, C), dtype=jnp.float32)
    for h in range(num_heads):                                # static unroll (8 heads)
        lo = h * hd
        q_h = qkv[:, lo:lo + hd]                              # (N, hd) -- already scaled
        k_h = qkv[:, C + lo:C + lo + hd]                      # (N, hd)
        v_h = qkv[:, 2 * C + lo:2 * C + lo + hd]              # (N, hd)

        # scores = q_h @ k_h.T  (scale already folded into q columns of w_qkv)
        s = jnp.einsum("nd,md->nm", q_h, k_h,
                       preferred_element_type=jnp.float32)    # (N, N)
        s = s - jnp.max(s, axis=-1, keepdims=True)
        p = jnp.exp(s)
        inv = pl.reciprocal(jnp.sum(p, axis=-1, keepdims=True), approx=True)
        p = p * inv                                           # softmax rows
        # TODO(synk): attn_drop / proj_drop have p=0.0 (identity); dropout not implemented.

        o_h = jnp.dot(p, v_h, preferred_element_type=jnp.float32)          # (N, hd)
        acc = acc + jnp.dot(o_h, wproj_ref[lo:lo + hd, :],
                            preferred_element_type=jnp.float32)            # (N, C)

    out = acc + bproj_ref[...].astype(jnp.float32)            # broadcast (1, C)
    o_ref[...] = out.astype(o_ref.dtype)


# ---------------------------------------------------------------------------
# Module-equivalent forward
# ---------------------------------------------------------------------------
def attention_forward(x, params, num_heads):
    B, N, C = x.shape
    hd = C // num_heads
    scale = hd ** (-0.5)

    # Fold the softmax scale into the q columns of w_qkv (zero-cost under jit).
    w_qkv = params["w_qkv"]
    w_qkv = jnp.concatenate([w_qkv[:, :C] * scale, w_qkv[:, C:]], axis=1)
    w_proj = params["w_proj"]
    b_proj = params["b_proj"].reshape(1, C)

    x2d = x.reshape(B * N, C)                                  # contiguous, free

    out2d = pl.pallas_call(
        functools.partial(_fused_attn_kernel, num_heads=num_heads),
        out_shape=jax.ShapeDtypeStruct((B * N, C), x.dtype),
        grid_spec=pltpu.PrefetchScalarGridSpec(
            num_scalar_prefetch=0,
            grid=(B,),
            in_specs=[
                pl.BlockSpec((N, C), lambda b: (b, 0)),        # tokens of batch b
                pl.BlockSpec((C, 3 * C), lambda b: (0, 0)),    # w_qkv (resident)
                pl.BlockSpec((C, C), lambda b: (0, 0)),        # w_proj (resident)
                pl.BlockSpec((1, C), lambda b: (0, 0)),        # b_proj (resident)
            ],
            out_specs=pl.BlockSpec((N, C), lambda b: (b, 0)),  # lane-dense output slab
        ),
        compiler_params=pltpu.CompilerParams(
            dimension_semantics=("parallel",)),                # v7x: 2 TCs split batch
    )(x2d, w_qkv, w_proj, b_proj)

    return out2d.reshape(B, N, C)


# ---------------------------------------------------------------------------
# Pure-JAX reference for sanity checking
# ---------------------------------------------------------------------------
def attention_reference(x, params, num_heads):
    B, N, C = x.shape
    hd = C // num_heads
    scale = hd ** (-0.5)
    qkv = x @ params["w_qkv"]                                  # qkv_bias=False
    qkv = qkv.reshape(B, N, 3, num_heads, hd).transpose(2, 0, 3, 1, 4)
    q, k, v = qkv[0], qkv[1], qkv[2]
    attn = (q @ jnp.swapaxes(k, -2, -1)) * scale
    attn = jax.nn.softmax(attn, axis=-1)
    o = (attn @ v).transpose(0, 2, 1, 3).reshape(B, N, C)
    return o @ params["w_proj"] + params["b_proj"]


if __name__ == "__main__":
    B, N, C, H = 2, 8, 32, 8

    key = jax.random.PRNGKey(0)
    k_x, k_wqkv, k_wproj, k_bproj = jax.random.split(key, 4)

    x = jax.random.normal(k_x, (B, N, C), dtype=jnp.float32)

    # Parameters stored as (in, out) so forward is x @ W + b
    # (PyTorch stores (out, in) and uses x @ W.T).  qkv_bias=False -> no qkv bias.
    params = {
        "w_qkv": jax.random.normal(k_wqkv, (C, 3 * C), dtype=jnp.float32) * 0.02,
        "w_proj": jax.random.normal(k_wproj, (C, C), dtype=jnp.float32) * 0.02,
        "b_proj": jax.random.normal(k_bproj, (C,), dtype=jnp.float32) * 0.02,
    }

    out = attention_forward(x, params, H)
    out = jax.block_until_ready(out)

    ref = attention_reference(x, params, H)
    assert out.shape == (B, N, C)
    # Slightly relaxed tolerance: kernel uses the EUP approximate reciprocal for the
    # softmax normalization (pl.reciprocal(..., approx=True)), ~2^-12 relative error.
    assert jnp.allclose(out, ref, rtol=1e-3, atol=1e-4), "mismatch vs reference"

    print("KERNEL_OK")
</pallas_src>

<mosaic_0001>
module attributes {stable_mosaic.version = 11 : i64} {
  func.func @_fused_attn_kernel(%arg0: i32, %arg1: memref<8x32xf32, #tpu.memory_space<vmem>>, %arg2: memref<32x96xf32, #tpu.memory_space<vmem>>, %arg3: memref<32x32xf32, #tpu.memory_space<vmem>>, %arg4: memref<1x32xf32, #tpu.memory_space<vmem>>, %arg5: memref<8x32xf32, #tpu.memory_space<vmem>>) attributes {dimension_semantics = [#tpu.dimension_semantics<parallel>], iteration_bounds = array<i64: 2>, scalar_prefetch = 0 : i64, scratch_operands = 0 : i64, tpu.core_type = #tpu.core_type<tc>, window_params = [{transform_indices = @transform_0, window_bounds = array<i64: 8, 32>}, {pipeline_mode = #tpu.pipeline_mode<synchronous>, transform_indices = @transform_1, window_bounds = array<i64: 32, 96>}, {pipeline_mode = #tpu.pipeline_mode<synchronous>, transform_indices = @transform_2, window_bounds = array<i64: 32, 32>}, {pipeline_mode = #tpu.pipeline_mode<synchronous>, transform_indices = @transform_3, window_bounds = array<i64: 1, 32>}, {transform_indices = @transform_4, window_bounds = array<i64: 8, 32>}]} {
    %c0 = arith.constant 0 : index
    %c0_0 = arith.constant 0 : index
    %0 = vector.load %arg1[%c0, %c0_0] : memref<8x32xf32, #tpu.memory_space<vmem>>, vector<8x32xf32>
    %c0_1 = arith.constant 0 : index
    %c0_2 = arith.constant 0 : index
    %1 = vector.load %arg2[%c0_1, %c0_2] : memref<32x96xf32, #tpu.memory_space<vmem>>, vector<32x96xf32>
    %cst = arith.constant dense<0.000000e+00> : vector<8x96xf32>
    %2 = tpu.matmul %0, %1, %cst {dimension_numbers = #tpu.dot_dimension_numbers<[1], [0], [0], [1], [0, 0, 1, 1], [], []>} : vector<8x32xf32>, vector<32x96xf32>, vector<8x96xf32> -> vector<8x96xf32>
    %cst_3 = arith.constant 0.000000e+00 : f32
    %3 = vector.broadcast %cst_3 : f32 to vector<8x32xf32>
    %4 = vector.extract_strided_slice %2 {offsets = [0, 0], sizes = [8, 4], strides = [1, 1]} : vector<8x96xf32> to vector<8x4xf32>
    %5 = vector.extract_strided_slice %2 {offsets = [0, 32], sizes = [8, 4], strides = [1, 1]} : vector<8x96xf32> to vector<8x4xf32>
    %6 = vector.extract_strided_slice %2 {offsets = [0, 64], sizes = [8, 4], strides = [1, 1]} : vector<8x96xf32> to vector<8x4xf32>
    "tpu.trace_start"() <{level = 10 : i32, message = "nd,md->nm"}> : () -> ()
    %cst_4 = arith.constant dense<0.000000e+00> : vector<8x8xf32>
    %7 = tpu.matmul %4, %5, %cst_4 {dimension_numbers = #tpu.dot_dimension_numbers<[1], [1], [0], [0], [0, 0, 1, 0], [], []>} : vector<8x4xf32>, vector<8x4xf32>, vector<8x8xf32> -> vector<8x8xf32>
    "tpu.trace_stop"() : () -> ()
    %cst_5 = arith.constant dense<0xFF800000> : vector<8xf32>
    %8 = vector.multi_reduction <maximumf>, %7, %cst_5 [1] : vector<8x8xf32> to vector<8xf32>
    %9 = vector.shape_cast %8 : vector<8xf32> to vector<8x1xf32>
    %10 = vector.broadcast %9 : vector<8x1xf32> to vector<8x8xf32>
    %11 = arith.subf %7, %10 : vector<8x8xf32>
    %12 = math.exp %11 : vector<8x8xf32>
    %cst_6 = arith.constant dense<0.000000e+00> : vector<8xf32>
    %13 = vector.multi_reduction <add>, %12, %cst_6 [1] : vector<8x8xf32> to vector<8xf32>
    %14 = vector.shape_cast %13 : vector<8xf32> to vector<8x1xf32>
    %15 = tpu.reciprocal %14 {approx = true} : vector<8x1xf32> -> vector<8x1xf32>
    %16 = vector.broadcast %15 : vector<8x1xf32> to vector<8x8xf32>
    %17 = arith.mulf %12, %16 : vector<8x8xf32>
    %cst_7 = arith.constant dense<0.000000e+00> : vector<8x4xf32>
    %18 = tpu.matmul %17, %6, %cst_7 {dimension_numbers = #tpu.dot_dimension_numbers<[1], [0], [0], [1], [0, 0, 1, 1], [], []>} : vector<8x8xf32>, vector<8x4xf32>, vector<8x4xf32> -> vector<8x4xf32>
    %c0_8 = arith.constant 0 : index
    %c0_9 = arith.constant 0 : index
    %19 = vector.load %arg3[%c0_8, %c0_9] : memref<32x32xf32, #tpu.memory_space<vmem>>, vector<4x32xf32>
    %cst_10 = arith.constant dense<0.000000e+00> : vector<8x32xf32>
    %20 = tpu.matmul %18, %19, %cst_10 {dimension_numbers = #tpu.dot_dimension_numbers<[1], [0], [0], [1], [0, 0, 1, 1], [], []>} : vector<8x4xf32>, vector<4x32xf32>, vector<8x32xf32> -> vector<8x32xf32>
    %21 = arith.addf %3, %20 : vector<8x32xf32>
    %22 = vector.extract_strided_slice %2 {offsets = [0, 4], sizes = [8, 4], strides = [1, 1]} : vector<8x96xf32> to vector<8x4xf32>
    %23 = vector.extract_strided_slice %2 {offsets = [0, 36], sizes = [8, 4], strides = [1, 1]} : vector<8x96xf32> to vector<8x4xf32>
    %24 = vector.extract_strided_slice %2 {offsets = [0, 68], sizes = [8, 4], strides = [1, 1]} : vector<8x96xf32> to vector<8x4xf32>
    "tpu.trace_start"() <{level = 10 : i32, message = "nd,md->nm"}> : () -> ()
    %cst_11 = arith.constant dense<0.000000e+00> : vector<8x8xf32>
    %25 = tpu.matmul %22, %23, %cst_11 {dimension_numbers = #tpu.dot_dimension_numbers<[1], [1], [0], [0], [0, 0, 1, 0], [], []>} : vector<8x4xf32>, vector<8x4xf32>, vector<8x8xf32> -> vector<8x8xf32>
    "tpu.trace_stop"() : () -> ()
    %cst_12 = arith.constant dense<0xFF800000> : vector<8xf32>
    %26 = vector.multi_reduction <maximumf>, %25, %cst_12 [1] : vector<8x8xf32> to vector<8xf32>
    %27 = vector.shape_cast %26 : vector<8xf32> to vector<8x1xf32>
    %28 = vector.broadcast %27 : vector<8x1xf32> to vector<8x8xf32>
    %29 = arith.subf %25, %28 : vector<8x8xf32>
    %30 = math.exp %29 : vector<8x8xf32>
    %cst_13 = arith.constant dense<0.000000e+00> : vector<8xf32>
    %31 = vector.multi_reduction <add>, %30, %cst_13 [1] : vector<8x8xf32> to vector<8xf32>
    %32 = vector.shape_cast %31 : vector<8xf32> to vector<8x1xf32>
    %33 = tpu.reciprocal %32 {approx = true} : vector<8x1xf32> -> vector<8x1xf32>
    %34 = vector.broadcast %33 : vector<8x1xf32> to vector<8x8xf32>
    %35 = arith.mulf %30, %34 : vector<8x8xf32>
    %cst_14 = arith.constant dense<0.000000e+00> : vector<8x4xf32>
    %36 = tpu.matmul %35, %24, %cst_14 {dimension_numbers = #tpu.dot_dimension_numbers<[1], [0], [0], [1], [0, 0, 1, 1], [], []>} : vector<8x8xf32>, vector<8x4xf32>, vector<8x4xf32> -> vector<8x4xf32>
    %c4 = arith.constant 4 : index
    %c0_15 = arith.constant 0 : index
    %37 = vector.load %arg3[%c4, %c0_15] : memref<32x32xf32, #tpu.memory_space<vmem>>, vector<4x32xf32>
    %cst_16 = arith.constant dense<0.000000e+00> : vector<8x32xf32>
    %38 = tpu.matmul %36, %37, %cst_16 {dimension_numbers = #tpu.dot_dimension_numbers<[1], [0], [0], [1], [0, 0, 1, 1], [], []>} : vector<8x4xf32>, vector<4x32xf32>, vector<8x32xf32> -> vector<8x32xf32>
    %39 = arith.addf %21, %38 : vector<8x32xf32>
    %40 = vector.extract_strided_slice %2 {offsets = [0, 8], sizes = [8, 4], strides = [1, 1]} : vector<8x96xf32> to vector<8x4xf32>
    %41 = vector.extract_strided_slice %2 {offsets = [0, 40], sizes = [8, 4], strides = [1, 1]} : vector<8x96xf32> to vector<8x4xf32>
    %42 = vector.extract_strided_slice %2 {offsets = [0, 72], sizes = [8, 4], strides = [1, 1]} : vector<8x96xf32> to vector<8x4xf32>
    "tpu.trace_start"() <{level = 10 : i32, message = "nd,md->nm"}> : () -> ()
    %cst_17 = arith.constant dense<0.000000e+00> : vector<8x8xf32>
    %43 = tpu.matmul %40, %41, %cst_17 {dimension_numbers = #tpu.dot_dimension_numbers<[1], [1], [0], [0], [0, 0, 1, 0], [], []>} : vector<8x4xf32>, vector<8x4xf32>, vector<8x8xf32> -> vector<8x8xf32>
    "tpu.trace_stop"() : () -> ()
    %cst_18 = arith.constant dense<0xFF800000> : vector<8xf32>
    %44 = vector.multi_reduction <maximumf>, %43, %cst_18 [1] : vector<8x8xf32> to vector<8xf32>
    %45 = vector.shape_cast %44 : vector<8xf32> to vector<8x1xf32>
    %46 = vector.broadcast %45 : vector<8x1xf32> to vector<8x8xf32>
    %47 = arith.subf %43, %46 : vector<8x8xf32>
    %48 = math.exp %47 : vector<8x8xf32>
    %cst_19 = arith.constant dense<0.000000e+00> : vector<8xf32>
    %49 = vector.multi_reduction <add>, %48, %cst_19 [1] : vector<8x8xf32> to vector<8xf32>
    %50 = vector.shape_cast %49 : vector<8xf32> to vector<8x1xf32>
    %51 = tpu.reciprocal %50 {approx = true} : vector<8x1xf32> -> vector<8x1xf32>
    %52 = vector.broadcast %51 : vector<8x1xf32> to vector<8x8xf32>
    %53 = arith.mulf %48, %52 : vector<8x8xf32>
    %cst_20 = arith.constant dense<0.000000e+00> : vector<8x4xf32>
    %54 = tpu.matmul %53, %42, %cst_20 {dimension_numbers = #tpu.dot_dimension_numbers<[1], [0], [0], [1], [0, 0, 1, 1], [], []>} : vector<8x8xf32>, vector<8x4xf32>, vector<8x4xf32> -> vector<8x4xf32>
    %c8 = arith.constant 8 : index
    %c0_21 = arith.constant 0 : index
    %55 = vector.load %arg3[%c8, %c0_21] : memref<32x32xf32, #tpu.memory_space<vmem>>, vector<4x32xf32>
    %cst_22 = arith.constant dense<0.000000e+00> : vector<8x32xf32>
    %56 = tpu.matmul %54, %55, %cst_22 {dimension_numbers = #tpu.dot_dimension_numbers<[1], [0], [0], [1], [0, 0, 1, 1], [], []>} : vector<8x4xf32>, vector<4x32xf32>, vector<8x32xf32> -> vector<8x32xf32>
    %57 = arith.addf %39, %56 : vector<8x32xf32>
    %58 = vector.extract_strided_slice %2 {offsets = [0, 12], sizes = [8, 4], strides = [1, 1]} : vector<8x96xf32> to vector<8x4xf32>
    %59 = vector.extract_strided_slice %2 {offsets = [0, 44], sizes = [8, 4], strides = [1, 1]} : vector<8x96xf32> to vector<8x4xf32>
    %60 = vector.extract_strided_slice %2 {offsets = [0, 76], sizes = [8, 4], strides = [1, 1]} : vector<8x96xf32> to vector<8x4xf32>
    "tpu.trace_start"() <{level = 10 : i32, message = "nd,md->nm"}> : () -> ()
    %cst_23 = arith.constant dense<0.000000e+00> : vector<8x8xf32>
    %61 = tpu.matmul %58, %59, %cst_23 {dimension_numbers = #tpu.dot_dimension_numbers<[1], [1], [0], [0], [0, 0, 1, 0], [], []>} : vector<8x4xf32>, vector<8x4xf32>, vector<8x8xf32> -> vector<8x8xf32>
    "tpu.trace_stop"() : () -> ()
    %cst_24 = arith.constant dense<0xFF800000> : vector<8xf32>
    %62 = vector.multi_reduction <maximumf>, %61, %cst_24 [1] : vector<8x8xf32> to vector<8xf32>
    %63 = vector.shape_cast %62 : vector<8xf32> to vector<8x1xf32>
    %64 = vector.broadcast %63 : vector<8x1xf32> to vector<8x8xf32>
    %65 = arith.subf %61, %64 : vector<8x8xf32>
    %66 = math.exp %65 : vector<8x8xf32>
    %cst_25 = arith.constant dense<0.000000e+00> : vector<8xf32>
    %67 = vector.multi_reduction <add>, %66, %cst_25 [1] : vector<8x8xf32> to vector<8xf32>
    %68 = vector.shape_cast %67 : vector<8xf32> to vector<8x1xf32>
    %69 = tpu.reciprocal %68 {approx = true} : vector<8x1xf32> -> vector<8x1xf32>
    %70 = vector.broadcast %69 : vector<8x1xf32> to vector<8x8xf32>
    %71 = arith.mulf %66, %70 : vector<8x8xf32>
    %cst_26 = arith.constant dense<0.000000e+00> : vector<8x4xf32>
    %72 = tpu.matmul %71, %60, %cst_26 {dimension_numbers = #tpu.dot_dimension_numbers<[1], [0], [0], [1], [0, 0, 1, 1], [], []>} : vector<8x8xf32>, vector<8x4xf32>, vector<8x4xf32> -> vector<8x4xf32>
    %c12 = arith.constant 12 : index
    %c0_27 = arith.constant 0 : index
    %73 = vector.load %arg3[%c12, %c0_27] : memref<32x32xf32, #tpu.memory_space<vmem>>, vector<4x32xf32>
    %cst_28 = arith.constant dense<0.000000e+00> : vector<8x32xf32>
    %74 = tpu.matmul %72, %73, %cst_28 {dimension_numbers = #tpu.dot_dimension_numbers<[1], [0], [0], [1], [0, 0, 1, 1], [], []>} : vector<8x4xf32>, vector<4x32xf32>, vector<8x32xf32> -> vector<8x32xf32>
    %75 = arith.addf %57, %74 : vector<8x32xf32>
    %76 = vector.extract_strided_slice %2 {offsets = [0, 16], sizes = [8, 4], strides = [1, 1]} : vector<8x96xf32> to vector<8x4xf32>
    %77 = vector.extract_strided_slice %2 {offsets = [0, 48], sizes = [8, 4], strides = [1, 1]} : vector<8x96xf32> to vector<8x4xf32>
    %78 = vector.extract_strided_slice %2 {offsets = [0, 80], sizes = [8, 4], strides = [1, 1]} : vector<8x96xf32> to vector<8x4xf32>
    "tpu.trace_start"() <{level = 10 : i32, message = "nd,md->nm"}> : () -> ()
    %cst_29 = arith.constant dense<0.000000e+00> : vector<8x8xf32>
    %79 = tpu.matmul %76, %77, %cst_29 {dimension_numbers = #tpu.dot_dimension_numbers<[1], [1], [0], [0], [0, 0, 1, 0], [], []>} : vector<8x4xf32>, vector<8x4xf32>, vector<8x8xf32> -> vector<8x8xf32>
    "tpu.trace_stop"() : () -> ()
    %cst_30 = arith.constant dense<0xFF800000> : vector<8xf32>
    %80 = vector.multi_reduction <maximumf>, %79, %cst_30 [1] : vector<8x8xf32> to vector<8xf32>
    %81 = vector.shape_cast %80 : vector<8xf32> to vector<8x1xf32>
    %82 = vector.broadcast %81 : vector<8x1xf32> to vector<8x8xf32>
    %83 = arith.subf %79, %82 : vector<8x8xf32>
    %84 = math.exp %83 : vector<8x8xf32>
    %cst_31 = arith.constant dense<0.000000e+00> : vector<8xf32>
    %85 = vector.multi_reduction <add>, %84, %cst_31 [1] : vector<8x8xf32> to vector<8xf32>
    %86 = vector.shape_cast %85 : vector<8xf32> to vector<8x1xf32>
    %87 = tpu.reciprocal %86 {approx = true} : vector<8x1xf32> -> vector<8x1xf32>
    %88 = vector.broadcast %87 : vector<8x1xf32> to vector<8x8xf32>
    %89 = arith.mulf %84, %88 : vector<8x8xf32>
    %cst_32 = arith.constant dense<0.000000e+00> : vector<8x4xf32>
    %90 = tpu.matmul %89, %78, %cst_32 {dimension_numbers = #tpu.dot_dimension_numbers<[1], [0], [0], [1], [0, 0, 1, 1], [], []>} : vector<8x8xf32>, vector<8x4xf32>, vector<8x4xf32> -> vector<8x4xf32>
    %c16 = arith.constant 16 : index
    %c0_33 = arith.constant 0 : index
    %91 = vector.load %arg3[%c16, %c0_33] : memref<32x32xf32, #tpu.memory_space<vmem>>, vector<4x32xf32>
    %cst_34 = arith.constant dense<0.000000e+00> : vector<8x32xf32>
    %92 = tpu.matmul %90, %91, %cst_34 {dimension_numbers = #tpu.dot_dimension_numbers<[1], [0], [0], [1], [0, 0, 1, 1], [], []>} : vector<8x4xf32>, vector<4x32xf32>, vector<8x32xf32> -> vector<8x32xf32>
    %93 = arith.addf %75, %92 : vector<8x32xf32>
    %94 = vector.extract_strided_slice %2 {offsets = [0, 20], sizes = [8, 4], strides = [1, 1]} : vector<8x96xf32> to vector<8x4xf32>
    %95 = vector.extract_strided_slice %2 {offsets = [0, 52], sizes = [8, 4], strides = [1, 1]} : vector<8x96xf32> to vector<8x4xf32>
    %96 = vector.extract_strided_slice %2 {offsets = [0, 84], sizes = [8, 4], strides = [1, 1]} : vector<8x96xf32> to vector<8x4xf32>
    "tpu.trace_start"() <{level = 10 : i32, message = "nd,md->nm"}> : () -> ()
    %cst_35 = arith.constant dense<0.000000e+00> : vector<8x8xf32>
    %97 = tpu.matmul %94, %95, %cst_35 {dimension_numbers = #tpu.dot_dimension_numbers<[1], [1], [0], [0], [0, 0, 1, 0], [], []>} : vector<8x4xf32>, vector<8x4xf32>, vector<8x8xf32> -> vector<8x8xf32>
    "tpu.trace_stop"() : () -> ()
    %cst_36 = arith.constant dense<0xFF800000> : vector<8xf32>
    %98 = vector.multi_reduction <maximumf>, %97, %cst_36 [1] : vector<8x8xf32> to vector<8xf32>
    %99 = vector.shape_cast %98 : vector<8xf32> to vector<8x1xf32>
    %100 = vector.broadcast %99 : vector<8x1xf32> to vector<8x8xf32>
    %101 = arith.subf %97, %100 : vector<8x8xf32>
    %102 = math.exp %101 : vector<8x8xf32>
    %cst_37 = arith.constant dense<0.000000e+00> : vector<8xf32>
    %103 = vector.multi_reduction <add>, %102, %cst_37 [1] : vector<8x8xf32> to vector<8xf32>
    %104 = vector.shape_cast %103 : vector<8xf32> to vector<8x1xf32>
    %105 = tpu.reciprocal %104 {approx = true} : vector<8x1xf32> -> vector<8x1xf32>
    %106 = vector.broadcast %105 : vector<8x1xf32> to vector<8x8xf32>
    %107 = arith.mulf %102, %106 : vector<8x8xf32>
    %cst_38 = arith.constant dense<0.000000e+00> : vector<8x4xf32>
    %108 = tpu.matmul %107, %96, %cst_38 {dimension_numbers = #tpu.dot_dimension_numbers<[1], [0], [0], [1], [0, 0, 1, 1], [], []>} : vector<8x8xf32>, vector<8x4xf32>, vector<8x4xf32> -> vector<8x4xf32>
    %c20 = arith.constant 20 : index
    %c0_39 = arith.constant 0 : index
    %109 = vector.load %arg3[%c20, %c0_39] : memref<32x32xf32, #tpu.memory_space<vmem>>, vector<4x32xf32>
    %cst_40 = arith.constant dense<0.000000e+00> : vector<8x32xf32>
    %110 = tpu.matmul %108, %109, %cst_40 {dimension_numbers = #tpu.dot_dimension_numbers<[1], [0], [0], [1], [0, 0, 1, 1], [], []>} : vector<8x4xf32>, vector<4x32xf32>, vector<8x32xf32> -> vector<8x32xf32>
    %111 = arith.addf %93, %110 : vector<8x32xf32>
    %112 = vector.extract_strided_slice %2 {offsets = [0, 24], sizes = [8, 4], strides = [1, 1]} : vector<8x96xf32> to vector<8x4xf32>
    %113 = vector.extract_strided_slice %2 {offsets = [0, 56], sizes = [8, 4], strides = [1, 1]} : vector<8x96xf32> to vector<8x4xf32>
    %114 = vector.extract_strided_slice %2 {offsets = [0, 88], sizes = [8, 4], strides = [1, 1]} : vector<8x96xf32> to vector<8x4xf32>
    "tpu.trace_start"() <{level = 10 : i32, message = "nd,md->nm"}> : () -> ()
    %cst_41 = arith.constant dense<0.000000e+00> : vector<8x8xf32>
    %115 = tpu.matmul %112, %113, %cst_41 {dimension_numbers = #tpu.dot_dimension_numbers<[1], [1], [0], [0], [0, 0, 1, 0], [], []>} : vector<8x4xf32>, vector<8x4xf32>, vector<8x8xf32> -> vector<8x8xf32>
    "tpu.trace_stop"() : () -> ()
    %cst_42 = arith.constant dense<0xFF800000> : vector<8xf32>
    %116 = vector.multi_reduction <maximumf>, %115, %cst_42 [1] : vector<8x8xf32> to vector<8xf32>
    %117 = vector.shape_cast %116 : vector<8xf32> to vector<8x1xf32>
    %118 = vector.broadcast %117 : vector<8x1xf32> to vector<8x8xf32>
    %119 = arith.subf %115, %118 : vector<8x8xf32>
    %120 = math.exp %119 : vector<8x8xf32>
    %cst_43 = arith.constant dense<0.000000e+00> : vector<8xf32>
    %121 = vector.multi_reduction <add>, %120, %cst_43 [1] : vector<8x8xf32> to vector<8xf32>
    %122 = vector.shape_cast %121 : vector<8xf32> to vector<8x1xf32>
    %123 = tpu.reciprocal %122 {approx = true} : vector<8x1xf32> -> vector<8x1xf32>
    %124 = vector.broadcast %123 : vector<8x1xf32> to vector<8x8xf32>
    %125 = arith.mulf %120, %124 : vector<8x8xf32>
    %cst_44 = arith.constant dense<0.000000e+00> : vector<8x4xf32>
    %126 = tpu.matmul %125, %114, %cst_44 {dimension_numbers = #tpu.dot_dimension_numbers<[1], [0], [0], [1], [0, 0, 1, 1], [], []>} : vector<8x8xf32>, vector<8x4xf32>, vector<8x4xf32> -> vector<8x4xf32>
    %c24 = arith.constant 24 : index
    %c0_45 = arith.constant 0 : index
    %127 = vector.load %arg3[%c24, %c0_45] : memref<32x32xf32, #tpu.memory_space<vmem>>, vector<4x32xf32>
    %cst_46 = arith.constant dense<0.000000e+00> : vector<8x32xf32>
    %128 = tpu.matmul %126, %127, %cst_46 {dimension_numbers = #tpu.dot_dimension_numbers<[1], [0], [0], [1], [0, 0, 1, 1], [], []>} : vector<8x4xf32>, vector<4x32xf32>, vector<8x32xf32> -> vector<8x32xf32>
    %129 = arith.addf %111, %128 : vector<8x32xf32>
    %130 = vector.extract_strided_slice %2 {offsets = [0, 28], sizes = [8, 4], strides = [1, 1]} : vector<8x96xf32> to vector<8x4xf32>
    %131 = vector.extract_strided_slice %2 {offsets = [0, 60], sizes = [8, 4], strides = [1, 1]} : vector<8x96xf32> to vector<8x4xf32>
    %132 = vector.extract_strided_slice %2 {offsets = [0, 92], sizes = [8, 4], strides = [1, 1]} : vector<8x96xf32> to vector<8x4xf32>
    "tpu.trace_start"() <{level = 10 : i32, message = "nd,md->nm"}> : () -> ()
    %cst_47 = arith.constant dense<0.000000e+00> : vector<8x8xf32>
    %133 = tpu.matmul %130, %131, %cst_47 {dimension_numbers = #tpu.dot_dimension_numbers<[1], [1], [0], [0], [0, 0, 1, 0], [], []>} : vector<8x4xf32>, vector<8x4xf32>, vector<8x8xf32> -> vector<8x8xf32>
    "tpu.trace_stop"() : () -> ()
    %cst_48 = arith.constant dense<0xFF800000> : vector<8xf32>
    %134 = vector.multi_reduction <maximumf>, %133, %cst_48 [1] : vector<8x8xf32> to vector<8xf32>
    %135 = vector.shape_cast %134 : vector<8xf32> to vector<8x1xf32>
    %136 = vector.broadcast %135 : vector<8x1xf32> to vector<8x8xf32>
    %137 = arith.subf %133, %136 : vector<8x8xf32>
    %138 = math.exp %137 : vector<8x8xf32>
    %cst_49 = arith.constant dense<0.000000e+00> : vector<8xf32>
    %139 = vector.multi_reduction <add>, %138, %cst_49 [1] : vector<8x8xf32> to vector<8xf32>
    %140 = vector.shape_cast %139 : vector<8xf32> to vector<8x1xf32>
    %141 = tpu.reciprocal %140 {approx = true} : vector<8x1xf32> -> vector<8x1xf32>
    %142 = vector.broadcast %141 : vector<8x1xf32> to vector<8x8xf32>
    %143 = arith.mulf %138, %142 : vector<8x8xf32>
    %cst_50 = arith.constant dense<0.000000e+00> : vector<8x4xf32>
    %144 = tpu.matmul %143, %132, %cst_50 {dimension_numbers = #tpu.dot_dimension_numbers<[1], [0], [0], [1], [0, 0, 1, 1], [], []>} : vector<8x8xf32>, vector<8x4xf32>, vector<8x4xf32> -> vector<8x4xf32>
    %c28 = arith.constant 28 : index
    %c0_51 = arith.constant 0 : index
    %145 = vector.load %arg3[%c28, %c0_51] : memref<32x32xf32, #tpu.memory_space<vmem>>, vector<4x32xf32>
    %cst_52 = arith.constant dense<0.000000e+00> : vector<8x32xf32>
    %146 = tpu.matmul %144, %145, %cst_52 {dimension_numbers = #tpu.dot_dimension_numbers<[1], [0], [0], [1], [0, 0, 1, 1], [], []>} : vector<8x4xf32>, vector<4x32xf32>, vector<8x32xf32> -> vector<8x32xf32>
    %147 = arith.addf %129, %146 : vector<8x32xf32>
    %c0_53 = arith.constant 0 : index
    %c0_54 = arith.constant 0 : index
    %148 = vector.load %arg4[%c0_53, %c0_54] : memref<1x32xf32, #tpu.memory_space<vmem>>, vector<1x32xf32>
    %149 = vector.broadcast %148 : vector<1x32xf32> to vector<8x32xf32>
    %150 = arith.addf %147, %149 : vector<8x32xf32>
    %c0_55 = arith.constant 0 : index
    %c0_56 = arith.constant 0 : index
    %151 = vector.load %arg5[%c0_55, %c0_56] : memref<8x32xf32, #tpu.memory_space<vmem>>, vector<8x32xf32>
    tpu.vector_store %arg5[%c0_55, %c0_56], %150 {strides = array<i32>} : memref<8x32xf32, #tpu.memory_space<vmem>>, vector<8x32xf32>,
    return
  }
  func.func @transform_0(%arg0: i32) -> (i32, i32) {
    %c0_i32 = arith.constant 0 : i32
    %c0_i32_0 = arith.constant 0 : i32
    return %arg0, %c0_i32 : i32, i32
  }
  func.func @transform_1(%arg0: i32) -> (i32, i32) {
    %c0_i32 = arith.constant 0 : i32
    %c0_i32_0 = arith.constant 0 : i32
    %c0_i32_1 = arith.constant 0 : i32
    return %c0_i32, %c0_i32_0 : i32, i32
  }
  func.func @transform_2(%arg0: i32) -> (i32, i32) {
    %c0_i32 = arith.constant 0 : i32
    %c0_i32_0 = arith.constant 0 : i32
    %c0_i32_1 = arith.constant 0 : i32
    return %c0_i32, %c0_i32_0 : i32, i32
  }
  func.func @transform_3(%arg0: i32) -> (i32, i32) {
    %c0_i32 = arith.constant 0 : i32
    %c0_i32_0 = arith.constant 0 : i32
    %c0_i32_1 = arith.constant 0 : i32
    return %c0_i32, %c0_i32_0 : i32, i32
  }
  func.func @transform_4(%arg0: i32) -> (i32, i32) {
    %c0_i32 = arith.constant 0 : i32
    %c0_i32_0 = arith.constant 0 : i32
    return %arg0, %c0_i32 : i32, i32
  }
}

</mosaic_0001>

<llo_original>
// kernel: tpu_custom_call.1
$region0: #{tpu_custom_call.1}
  #allocation0 [shape = 'u32[]', space=smem, size = 0x4, offset = 0x4, fixed_abs, tag = 'smem constant byte address 0x4 - core index']
  #allocation1 [shape = 'u32[144,128]{1,0:T(1,128)}', space=vmem, size = 0x12000, scoped, tag = 'internal scratch']
  %s0 = inlined_call_operand.hbm [shape: f32[16,32], index: 0, kind: input, shape index: {}]
  %s1 = inlined_call_operand.hbm [shape: f32[32,96], index: 1, kind: input, shape index: {}]
  %s2 = inlined_call_operand.hbm [shape: f32[32,32], index: 2, kind: input, shape index: {}]
  %s3 = inlined_call_operand.vmem [shape: f32[1,32], index: 3, kind: input, shape index: {}]
  %s4 = inlined_call_operand.hbm [shape: f32[16,32], index: 4, kind: output, shape index: {}]
  %s5 = sld [smem:[#allocation0]]
  $region61: #{tpu_custom_call.1} parent=0
    _
  %s7 = ssub.s32 1, %s5
  %s8 = scalar_select 0, %s7, %s5
  $region1: #{tpu_custom_call.1} parent=0
    #allocation2 [shape = 'u8[8192]{0}', space=vmem, size = 0x2000, scoped, tag = 'input window, operand 0']
    #allocation3 [shape = 's32[2]{0}', space=sflag, size = 0x8, scoped, tag = 'scoped memory for tpu_custom_call.1']
    #allocation4 [shape = 's32[2]{0}', space=sflag, size = 0x8, scoped, tag = 'scoped memory for tpu_custom_call.1']
    #allocation5 [shape = 'u8[16384]{0}', space=vmem, size = 0x4000, scoped, tag = 'input window, operand 1, single buffered']
    #allocation6 [shape = 's32[1]{0}', space=sflag, size = 0x4, scoped, tag = 'scoped memory for tpu_custom_call.1']
    #allocation7 [shape = 'u8[16384]{0}', space=vmem, size = 0x4000, scoped, tag = 'input window, operand 2, single buffered']
    #allocation8 [shape = 'u8[8192]{0}', space=vmem, size = 0x2000, scoped, tag = 'output window, operand 0']
    %9 = vsyncpa [#allocation3], 0
    %s10 = scalar_lea.sflag [#allocation3], 1
    %11 = vsyncpa %s10, 0
    %12 = vsyncpa [#allocation6], 0
    %13 = vsyncpa [#allocation4], 0
    %s14 = scalar_lea.sflag [#allocation4], 1
    %15 = vsyncpa %s14, 0
    loop: start=0, step=1, limit=4
    $region2: #{tpu_custom_call.1} parent=1 // loop_pre_header
      _
    $region3: #{tpu_custom_call.1} parent=1 // loop_header
      %s17 = sphi 0, %s21
      %p18 = scmp.ge.s32.totalorder %s17, 4
      %s27 = sphi 0, %s29
      %s30 = sphi 0, %s27
      %s31 = sphi 0, %s30
      %s47 = sphi 0, %s31
      %s51 = sphi 0, %s51
      %s53 = sphi 0, %s51
      %s54 = sphi 0, %s53
      %s68 = sphi 0, %s54
      %s72 = sphi 0, %s72
      %s74 = sphi 0, %s72
      %s75 = sphi 0, %s74
      %s89 = sphi 0, %s75
      %s93 = sphi 0, %s93
      %s95 = sphi 0, %s93
      %s96 = sphi 0, %s95
      %s110 = sphi 0, %s96
      %s116 = sphi 0, %s118
      %s119 = sphi 0, %s116
      %s120 = sphi 0, %s119
      %s136 = sphi 0, %s120
    $region4: #{tpu_custom_call.1} parent=1 // loop_header_branch
      %20 = sbr.rel (%p18) target = $region8
    $region5: #{tpu_custom_call.1} parent=1 // loop_body
      %s22 = ssub.s32 %s17, 1
      %s23 = ssub.s32 %s17, 2
      %s24 = sadd.s32 %s17, 1
      %s25 = ssub.s32 %s17, %s24
      %p26 = scmp.eq.s32.totalorder %s25, 0
      %s28 = sadd.s32 %s27, 1
      %s29 = scalar_select %p26, %s27, %s28
      %p32 = pneg %p26
      %p33 = scmp.eq.s32.totalorder %s17, 1
      %p34 = por %p32, %p33
      %p35 = scmp.ne.s32.totalorder %s27, %s30
      %p36 = scmp.eq.s32.totalorder %s17, 0
      %p37 = por %p35, %p36
      %p38 = scmp.ne.s32.totalorder %s27, %s30
      %p39 = scmp.eq.s32.totalorder %s22, 1
      %p40 = por %p38, %p39
      %p41 = scmp.ne.s32.totalorder %s30, %s31
      %p42 = scmp.eq.s32.totalorder %s22, 0
      %p43 = por %p41, %p42
      %p44 = scmp.ne.s32.totalorder %s30, %s31
      %p45 = scmp.eq.s32.totalorder %s23, 1
      %p46 = por %p44, %p45
      %p48 = scmp.ne.s32.totalorder %s31, %s47
      %p49 = scmp.eq.s32.totalorder %s23, 0
      %p50 = por %p48, %p49
      %s52 = sadd.s32 %s51, 1
      %p55 = scmp.eq.s32.totalorder %s17, 1
      %p56 = scmp.ne.s32.totalorder %s51, %s53
      %p57 = scmp.eq.s32.totalorder %s17, 0
      %p58 = por %p56, %p57
      %p59 = scmp.ne.s32.totalorder %s51, %s53
      %p60 = scmp.eq.s32.totalorder %s22, 1
      %p61 = por %p59, %p60
      %p62 = scmp.ne.s32.totalorder %s53, %s54
      %p63 = scmp.eq.s32.totalorder %s22, 0
      %p64 = por %p62, %p63
      %p65 = scmp.ne.s32.totalorder %s53, %s54
      %p66 = scmp.eq.s32.totalorder %s23, 1
      %p67 = por %p65, %p66
      %p69 = scmp.ne.s32.totalorder %s54, %s68
      %p70 = scmp.eq.s32.totalorder %s23, 0
      %p71 = por %p69, %p70
      %s73 = sadd.s32 %s72, 1
      %p76 = scmp.eq.s32.totalorder %s17, 1
      %p77 = scmp.ne.s32.totalorder %s72, %s74
      %p78 = scmp.eq.s32.totalorder %s17, 0
      %p79 = por %p77, %p78
      %p80 = scmp.ne.s32.totalorder %s72, %s74
      %p81 = scmp.eq.s32.totalorder %s22, 1
      %p82 = por %p80, %p81
      %p83 = scmp.ne.s32.totalorder %s74, %s75
      %p84 = scmp.eq.s32.totalorder %s22, 0
      %p85 = por %p83, %p84
      %p86 = scmp.ne.s32.totalorder %s74, %s75
      %p87 = scmp.eq.s32.totalorder %s23, 1
      %p88 = por %p86, %p87
      %p90 = scmp.ne.s32.totalorder %s75, %s89
      %p91 = scmp.eq.s32.totalorder %s23, 0
      %p92 = por %p90, %p91
      %s94 = sadd.s32 %s93, 1
      %p97 = scmp.eq.s32.totalorder %s17, 1
      %p98 = scmp.ne.s32.totalorder %s93, %s95
      %p99 = scmp.eq.s32.totalorder %s17, 0
      %p100 = por %p98, %p99
      %p101 = scmp.ne.s32.totalorder %s93, %s95
      %p102 = scmp.eq.s32.totalorder %s22, 1
      %p103 = por %p101, %p102
      %p104 = scmp.ne.s32.totalorder %s95, %s96
      %p105 = scmp.eq.s32.totalorder %s22, 0
      %p106 = por %p104, %p105
      %p107 = scmp.ne.s32.totalorder %s95, %s96
      %p108 = scmp.eq.s32.totalorder %s23, 1
      %p109 = por %p107, %p108
      %p111 = scmp.ne.s32.totalorder %s96, %s110
      %p112 = scmp.eq.s32.totalorder %s23, 0
      %p113 = por %p111, %p112
      %s114 = ssub.s32 %s17, %s24
      %p115 = scmp.eq.s32.totalorder %s114, 0
      %s117 = sadd.s32 %s116, 1
      %s118 = scalar_select %p115, %s116, %s117
      %p121 = pneg %p115
      %p122 = scmp.eq.s32.totalorder %s17, 1
      %p123 = por %p121, %p122
      %p124 = scmp.ne.s32.totalorder %s116, %s119
      %p125 = scmp.eq.s32.totalorder %s17, 0
      %p126 = por %p124, %p125
      %p127 = scmp.ne.s32.totalorder %s116, %s119
      %p128 = scmp.eq.s32.totalorder %s22, 1
      %p129 = por %p127, %p128
      %p130 = scmp.ne.s32.totalorder %s119, %s120
      %p131 = scmp.eq.s32.totalorder %s22, 0
      %p132 = por %p130, %p131
      %p133 = scmp.ne.s32.totalorder %s119, %s120
      %p134 = scmp.eq.s32.totalorder %s23, 1
      %p135 = por %p133, %p134
      %p137 = scmp.ne.s32.totalorder %s120, %s136
      %p138 = scmp.eq.s32.totalorder %s23, 0
      %p139 = por %p137, %p138
      %p140 = scmp.le.s32.totalorder 1, %s17
      %p141 = scmp.lt.s32.totalorder %s17, 3
      %p142 = pnand %p140, %p141
      %p143 = pneg %p142
      // Predicated region
      $region9: #{tpu_custom_call.1} parent=5 // pred_check
        _
      $region10: #{tpu_custom_call.1} parent=5 // pred_check_branch
        %145 = sbr.rel (%p142) target = $region12
      $region11: #{tpu_custom_call.1} parent=5 // pred_region
        %s146 = ssub.s32 %s17, 1
        // Predicated region
        $region13: #{tpu_custom_call.1} parent=11 // pred_check
          %p147 = pneg %p64
        $region14: #{tpu_custom_call.1} parent=11 // pred_check_branch
          %149 = sbr.rel (%p147) target = $region16
        $region15: #{tpu_custom_call.1} parent=11 // pred_region
          %s151 = ssub.s32 512, 512
          %152 = vsyncadd [#allocation6], %s151
          %s153 = sshll.u32 [#allocation5], 4
          %s154 = int_to_ptr.vmem [resolvable:$true] %s153
          %159 = dma.hbm_to_vmem [thread:$0]  %s1, 512, %s154, [#allocation6], 128, 128, 8
        $region16: #{tpu_custom_call.1} parent=11 // pred_fallthru
          _
        // Predicated region
        $region17: #{tpu_custom_call.1} parent=11 // pred_check
          %p160 = pneg %p85
        $region18: #{tpu_custom_call.1} parent=11 // pred_check_branch
          %162 = sbr.rel (%p160) target = $region20
        $region19: #{tpu_custom_call.1} parent=11 // pred_region
          %s164 = ssub.s32 512, 512
          %165 = vsyncadd [#allocation6], %s164
          %s166 = sshll.u32 [#allocation7], 4
          %s167 = int_to_ptr.vmem [resolvable:$true] %s166
          %172 = dma.hbm_to_vmem [thread:$0]  %s2, 512, %s167, [#allocation6], 128, 128, 8
        $region20: #{tpu_custom_call.1} parent=11 // pred_fallthru
          _
        // Predicated region
        $region21: #{tpu_custom_call.1} parent=11 // pred_check
          %p173 = pneg %p106
        $region22: #{tpu_custom_call.1} parent=11 // pred_check_branch
          %175 = sbr.rel (%p173) target = $region24
        $region23: #{tpu_custom_call.1} parent=11 // pred_region
          _
        $region24: #{tpu_custom_call.1} parent=11 // pred_fallthru
          _
      $region12: #{tpu_custom_call.1} parent=5 // pred_fallthru
        _
      %p176 = scmp.lt.s32.totalorder %s17, 2
      // Predicated region
      $region25: #{tpu_custom_call.1} parent=5 // pred_check
        %p177 = pneg %p176
      $region26: #{tpu_custom_call.1} parent=5 // pred_check_branch
        %179 = sbr.rel (%p177) target = $region28
      $region27: #{tpu_custom_call.1} parent=5 // pred_region
        // Predicated region
        $region29: #{tpu_custom_call.1} parent=27 // pred_check
          %p180 = pneg %p37
        $region30: #{tpu_custom_call.1} parent=27 // pred_check_branch
          %182 = sbr.rel (%p180) target = $region32
        $region31: #{tpu_custom_call.1} parent=27 // pred_region
          %s183 = sand.u32 %s27, 1
          %s184 = scalar_lea.sflag [#allocation3], %s183
          %s185 = sand.u32 %s27, 1
          %s186 = smul.addr %s185, 8
          %s187 = scalar_lea.vmem [#allocation2], %s186
          %s189 = ssub.s32 128, 128
          %190 = vsyncadd %s184, %s189
          %s191 = smul.addr %s17, 128
          %s192 = scalar_lea.hbm %s0, %s191
          %s194 = sshll.u32 %s187, 4
          %s195 = int_to_ptr.vmem [resolvable:$true] %s194
          %197 = dma.hbm_to_vmem [thread:$0]  %s192, 128, %s195, %s184
        $region32: #{tpu_custom_call.1} parent=27 // pred_fallthru
          _
      $region28: #{tpu_custom_call.1} parent=5 // pred_fallthru
        _
      %p198 = scmp.le.s32.totalorder 1, %s17
      %p199 = scmp.lt.s32.totalorder %s17, 3
      %p200 = pnand %p198, %p199
      %p201 = pneg %p200
      // Predicated region
      $region33: #{tpu_custom_call.1} parent=5 // pred_check
        _
      $region34: #{tpu_custom_call.1} parent=5 // pred_check_branch
        %203 = sbr.rel (%p200) target = $region36
      $region35: #{tpu_custom_call.1} parent=5 // pred_region
        %s204 = ssub.s32 %s17, 1
        %s205 = sand.u32 %s30, 1
        %s206 = scalar_lea.sflag [#allocation3], %s205
        %s207 = sand.u32 %s30, 1
        %s208 = smul.addr %s207, 8
        %s209 = scalar_lea.vmem [#allocation2], %s208
        // Predicated region
        $region37: #{tpu_custom_call.1} parent=35 // pred_check
          %p210 = pneg %p43
        $region38: #{tpu_custom_call.1} parent=35 // pred_check_branch
          %212 = sbr.rel (%p210) target = $region40
        $region39: #{tpu_custom_call.1} parent=35 // pred_region
          %213 = dma.done %s206, 128
        $region40: #{tpu_custom_call.1} parent=35 // pred_fallthru
          _
        // Predicated region
        $region41: #{tpu_custom_call.1} parent=35 // pred_check
          %p214 = pneg %p64
        $region42: #{tpu_custom_call.1} parent=35 // pred_check_branch
          %216 = sbr.rel (%p214) target = $region44
        $region43: #{tpu_custom_call.1} parent=35 // pred_region
          %217 = dma.done [#allocation6], 512
        $region44: #{tpu_custom_call.1} parent=35 // pred_fallthru
          _
        // Predicated region
        $region45: #{tpu_custom_call.1} parent=35 // pred_check
          %p218 = pneg %p85
        $region46: #{tpu_custom_call.1} parent=35 // pred_check_branch
          %220 = sbr.rel (%p218) target = $region48
        $region47: #{tpu_custom_call.1} parent=35 // pred_region
          %221 = dma.done [#allocation6], 512
        $region48: #{tpu_custom_call.1} parent=35 // pred_fallthru
          _
        %s222 = sand.u32 %s30, 1
        %s223 = scalar_lea.sflag [#allocation3], %s222
        %s224 = sand.u32 %s30, 1
        %s225 = smul.addr %s224, 8
        %s226 = scalar_lea.vmem [#allocation2], %s225
        %p227 = pneg %p43
        %p228 = pneg %p40
        %p229 = pneg %p64
        %p230 = pneg %p61
        %p231 = pneg %p85
        %p232 = pneg %p82
        %p233 = pneg %p106
        %p234 = pneg %p103
        %p235 = pneg %p132
        %p236 = pneg %p129
        %s237 = sand.u32 %s119, 1
        %s238 = scalar_lea.sflag [#allocation4], %s237
        %s239 = sand.u32 %s119, 1
        %s240 = smul.addr %s239, 8
        %s241 = scalar_lea.vmem [#allocation8], %s240
        %v242 = vld [vmem:[%s209] sm:$0xff]
        %v243 = vld [vmem:[#allocation5] sm:$0xff]
        %v244 = vld [vmem:[#allocation5 + $0x8] sm:$0xff]
        %v245 = vld [vmem:[#allocation5 + $0x10] sm:$0xff]
        %v246 = vld [vmem:[#allocation5 + $0x18] sm:$0xff]
        %vm247 = vcmask 261120
        %v249 = vsel %vm247, %v242, 0
        %251 = vmatprep.subr.mxu0 0.0
        %252 = vmatpush1.msra.mxu0 %v243
        %253 = vmatprep.subr.mxu0 0.0
        %254 = vmatpush1.msra.mxu0 %v244
        %255 = vmatprep.subr.mxu0 0.0
        %256 = vmatpush1.msra.mxu0 %v245
        %257 = vmatprep.subr.mxu0 0.0
        %258 = vmatpush1.msra.mxu0 %v246
        %259 = vmatprep.subr.mxu0 0.0
        %260 = vmatpush1.msra.mxu0 0.0
        %261 = vmatprep.subr.mxu0 0.0
        %262 = vmatpush1.msra.mxu0 0.0
        %263 = vmatprep.subr.mxu0 0.0
        %264 = vmatpush1.msra.mxu0 0.0
        %265 = vmatprep.subr.mxu0 0.0
        %266 = vmatpush1.msra.mxu0 0.0
        %267 = vmatprep.subr.mxu0 0.0
        %268 = vmatpush1.msra.mxu0 0.0
        %269 = vmatprep.subr.mxu0 0.0
        %270 = vmatpush1.msra.mxu0 0.0
        %271 = vmatprep.subr.mxu0 0.0
        %272 = vmatpush1.msra.mxu0 0.0
        %273 = vmatprep.subr.mxu0 0.0
        %274 = vmatpush1.msra.mxu0 0.0
        %275 = vmatprep.subr.mxu0 0.0
        %276 = vmatpush1.msra.mxu0 0.0
        %277 = vmatprep.subr.mxu0 0.0
        %278 = vmatpush1.msra.mxu0 0.0
        %279 = vmatprep.subr.mxu0 0.0
        %280 = vmatpush1.msra.mxu0 0.0
        %281 = vmatprep.subr.mxu0 0.0
        %282 = vmatpush1.msra.mxu0 0.0
        %283 = vmatprep.subr.mxu0 0.0
        %284 = vmatpush1.msra.mxu0 0.0
        %285 = vmatprep.subr.mxu0 0.0
        %286 = vmatpush1.msra.mxu0 0.0
        %287 = vmatprep.subr.mxu0 0.0
        %288 = vmatpush1.msra.mxu0 0.0
        %289 = vmatprep.subr.mxu0 0.0
        %290 = vmatpush1.msra.mxu0 0.0
        %291 = vmatprep.subr.mxu0 0.0
        %292 = vmatpush1.msra.mxu0 0.0
        %293 = vmatprep.subr.mxu0 0.0
        %294 = vmatpush1.msra.mxu0 0.0
        %295 = vmatprep.subr.mxu0 0.0
        %296 = vmatpush1.msra.mxu0 0.0
        %297 = vmatprep.subr.mxu0 0.0
        %298 = vmatpush1.msra.mxu0 0.0
        %299 = vmatprep.subr.mxu0 0.0
        %300 = vmatpush1.msra.mxu0 0.0
        %301 = vmatprep.subr.mxu0 0.0
        %302 = vmatpush1.msra.mxu0 0.0
        %303 = vmatprep.subr.mxu0 0.0
        %304 = vmatpush1.msra.mxu0 0.0
        %305 = vmatprep.subr.mxu0 0.0
        %306 = vmatpush1.msra.mxu0 0.0
        %307 = vmatprep.subr.mxu0 0.0
        %308 = vmatpush1.msra.mxu0 0.0
        %309 = vmatprep.subr.mxu0 0.0
        %310 = vmatpush1.msra.mxu0 0.0
        %311 = vmatprep.subr.mxu0 0.0
        %312 = vmatpush1.msra.mxu0 0.0
        %313 = vmatprep.subr.mxu0 0.0
        %314 = vmatpush1.msra.mxu0 0.0
        %315 = vmatprep.mubr.f32.mxu0 0.0
        %316 = vmatmul.mubr.f32.gmra.mrb[0].mxu0 %v249
        %v317 = vpop.f32.mrb[0].mxu0
        %v318 = vadd.f32 0.0, %v317
        %v319 = vpop.f32.mrb[0].mxu0
        %320 = vdwg.mxu0
        %322 = vrot.lane.b32.xlu0 %v318, 96
        %v323 = vpop.permute.xlu0 %322
        %vm324 = vcmask 31744
        %v325 = vsel %vm324, %v318, 0
        %v327 = vsel %vm324, %v323, 0
        %329 = vmatprep.subr.mxu0 0.0
        %330 = vmatpush1.xpose.msra.mxu0 %v327
        %331 = vmatprep.subr.mxu0 0.0
        %332 = vmatpush1.xpose.msra.mxu0 0.0
        %333 = vmatprep.subr.mxu0 0.0
        %334 = vmatpush1.xpose.msra.mxu0 0.0
        %335 = vmatprep.subr.mxu0 0.0
        %336 = vmatpush1.xpose.msra.mxu0 0.0
        %337 = vmatprep.subr.mxu0 0.0
        %338 = vmatpush1.xpose.msra.mxu0 0.0
        %339 = vmatprep.subr.mxu0 0.0
        %340 = vmatpush1.xpose.msra.mxu0 0.0
        %341 = vmatprep.subr.mxu0 0.0
        %342 = vmatpush1.xpose.msra.mxu0 0.0
        %343 = vmatprep.subr.mxu0 0.0
        %344 = vmatpush1.xpose.msra.mxu0 0.0
        %345 = vmatprep.subr.mxu0 0.0
        %346 = vmatpush1.xpose.msra.mxu0 0.0
        %347 = vmatprep.subr.mxu0 0.0
        %348 = vmatpush1.xpose.msra.mxu0 0.0
        %349 = vmatprep.subr.mxu0 0.0
        %350 = vmatpush1.xpose.msra.mxu0 0.0
        %351 = vmatprep.subr.mxu0 0.0
        %352 = vmatpush1.xpose.msra.mxu0 0.0
        %353 = vmatprep.subr.mxu0 0.0
        %354 = vmatpush1.xpose.msra.mxu0 0.0
        %355 = vmatprep.subr.mxu0 0.0
        %356 = vmatpush1.xpose.msra.mxu0 0.0
        %357 = vmatprep.subr.mxu0 0.0
        %358 = vmatpush1.xpose.msra.mxu0 0.0
        %359 = vmatprep.subr.mxu0 0.0
        %360 = vmatpush1.xpose.msra.mxu0 0.0
        %361 = vmatprep.subr.mxu0 0.0
        %362 = vmatpush1.xpose.msra.mxu0 0.0
        %363 = vmatprep.subr.mxu0 0.0
        %364 = vmatpush1.xpose.msra.mxu0 0.0
        %365 = vmatprep.subr.mxu0 0.0
        %366 = vmatpush1.xpose.msra.mxu0 0.0
        %367 = vmatprep.subr.mxu0 0.0
        %368 = vmatpush1.xpose.msra.mxu0 0.0
        %369 = vmatprep.subr.mxu0 0.0
        %370 = vmatpush1.xpose.msra.mxu0 0.0
        %371 = vmatprep.subr.mxu0 0.0
        %372 = vmatpush1.xpose.msra.mxu0 0.0
        %373 = vmatprep.subr.mxu0 0.0
        %374 = vmatpush1.xpose.msra.mxu0 0.0
        %375 = vmatprep.subr.mxu0 0.0
        %376 = vmatpush1.xpose.msra.mxu0 0.0
        %377 = vmatprep.subr.mxu0 0.0
        %378 = vmatpush1.xpose.msra.mxu0 0.0
        %379 = vmatprep.subr.mxu0 0.0
        %380 = vmatpush1.xpose.msra.mxu0 0.0
        %381 = vmatprep.subr.mxu0 0.0
        %382 = vmatpush1.xpose.msra.mxu0 0.0
        %383 = vmatprep.subr.mxu0 0.0
        %384 = vmatpush1.xpose.msra.mxu0 0.0
        %385 = vmatprep.subr.mxu0 0.0
        %386 = vmatpush1.xpose.msra.mxu0 0.0
        %387 = vmatprep.subr.mxu0 0.0
        %388 = vmatpush1.xpose.msra.mxu0 0.0
        %389 = vmatprep.subr.mxu0 0.0
        %390 = vmatpush1.xpose.msra.mxu0 0.0
        %391 = vmatprep.subr.mxu0 0.0
        %392 = vmatpush1.xpose.msra.mxu0 0.0
        %393 = vmatprep.mubr.f32.mxu0 0.0
        %394 = vmatmul.mubr.f32.gmra.mrb[0].mxu0 %v325
        %v395 = vpop.f32.mrb[0].mxu0
        %v396 = vadd.f32 0.0, %v395
        %v397 = vpop.f32.mrb[0].mxu0
        %398 = vdwg.mxu0
        %vm399 = vcmask 64512
        %v400 = vsel %vm399, %v396, -inf
        %401 = vmax.xlane.f32.xlu0 %v400
        %v402 = vpop.xlane.xlu0 %401
        %v403 = vsub.f32 %v396, %v402
        %v404 = vmul.f32 %v403, 1.442695
        %v405 = vpow.pop %v404
        %v406 = vsel %vm399, %v405, 0.0
        %407 = vadd.xlane.f32.xlu0 %v406
        %v408 = vpop.xlane.xlu0 %407
        %v409 = vrcp.pop %v408
        %v410 = vmul.f32 %v405, %v409
        %411 = vrot.lane.b32.xlu0 %v318, 64
        %v412 = vpop.permute.xlu0 %411
        %v415 = vsel %vm399, %v410, 0
        %417 = vmatprep.subr.mxu0 0.0
        %418 = vmatpush1.msra.mxu0 %v412
        %419 = vmatprep.subr.mxu0 0.0
        %420 = vmatpush1.msra.mxu0 0.0
        %421 = vmatprep.subr.mxu0 0.0
        %422 = vmatpush1.msra.mxu0 0.0
        %423 = vmatprep.subr.mxu0 0.0
        %424 = vmatpush1.msra.mxu0 0.0
        %425 = vmatprep.subr.mxu0 0.0
        %426 = vmatpush1.msra.mxu0 0.0
        %427 = vmatprep.subr.mxu0 0.0
        %428 = vmatpush1.msra.mxu0 0.0
        %429 = vmatprep.subr.mxu0 0.0
        %430 = vmatpush1.msra.mxu0 0.0
        %431 = vmatprep.subr.mxu0 0.0
        %432 = vmatpush1.msra.mxu0 0.0
        %433 = vmatprep.subr.mxu0 0.0
        %434 = vmatpush1.msra.mxu0 0.0
        %435 = vmatprep.subr.mxu0 0.0
        %436 = vmatpush1.msra.mxu0 0.0
        %437 = vmatprep.subr.mxu0 0.0
        %438 = vmatpush1.msra.mxu0 0.0
        %439 = vmatprep.subr.mxu0 0.0
        %440 = vmatpush1.msra.mxu0 0.0
        %441 = vmatprep.subr.mxu0 0.0
        %442 = vmatpush1.msra.mxu0 0.0
        %443 = vmatprep.subr.mxu0 0.0
        %444 = vmatpush1.msra.mxu0 0.0
        %445 = vmatprep.subr.mxu0 0.0
        %446 = vmatpush1.msra.mxu0 0.0
        %447 = vmatprep.subr.mxu0 0.0
        %448 = vmatpush1.msra.mxu0 0.0
        %449 = vmatprep.subr.mxu0 0.0
        %450 = vmatpush1.msra.mxu0 0.0
        %451 = vmatprep.subr.mxu0 0.0
        %452 = vmatpush1.msra.mxu0 0.0
        %453 = vmatprep.subr.mxu0 0.0
        %454 = vmatpush1.msra.mxu0 0.0
        %455 = vmatprep.subr.mxu0 0.0
        %456 = vmatpush1.msra.mxu0 0.0
        %457 = vmatprep.subr.mxu0 0.0
        %458 = vmatpush1.msra.mxu0 0.0
        %459 = vmatprep.subr.mxu0 0.0
        %460 = vmatpush1.msra.mxu0 0.0
        %461 = vmatprep.subr.mxu0 0.0
        %462 = vmatpush1.msra.mxu0 0.0
        %463 = vmatprep.subr.mxu0 0.0
        %464 = vmatpush1.msra.mxu0 0.0
        %465 = vmatprep.subr.mxu0 0.0
        %466 = vmatpush1.msra.mxu0 0.0
        %467 = vmatprep.subr.mxu0 0.0
        %468 = vmatpush1.msra.mxu0 0.0
        %469 = vmatprep.subr.mxu0 0.0
        %470 = vmatpush1.msra.mxu0 0.0
        %471 = vmatprep.subr.mxu0 0.0
        %472 = vmatpush1.msra.mxu0 0.0
        %473 = vmatprep.subr.mxu0 0.0
        %474 = vmatpush1.msra.mxu0 0.0
        %475 = vmatprep.subr.mxu0 0.0
        %476 = vmatpush1.msra.mxu0 0.0
        %477 = vmatprep.subr.mxu0 0.0
        %478 = vmatpush1.msra.mxu0 0.0
        %479 = vmatprep.subr.mxu0 0.0
        %480 = vmatpush1.msra.mxu0 0.0
        %481 = vmatprep.mubr.f32.mxu0 0.0
        %482 = vmatmul.mubr.f32.gmra.mrb[0].mxu0 %v415
        %v483 = vpop.f32.mrb[0].mxu0
        %v484 = vadd.f32 0.0, %v483
        %v485 = vpop.f32.mrb[0].mxu0
        %486 = vdwg.mxu0
        %v487 = vld [vmem:[#allocation7] sm:$0xf]
        %488 = vrot.lane.b32.xlu0 %v318, 124
        %v489 = vpop.permute.xlu0 %488
        %490 = vrot.lane.b32.xlu0 %v318, 92
        %v491 = vpop.permute.xlu0 %490
        %v492 = vsel %vm324, %v489, 0
        %v494 = vsel %vm324, %v491, 0
        %496 = vmatprep.subr.mxu0 0.0
        %497 = vmatpush1.xpose.msra.mxu0 %v494
        %498 = vmatprep.subr.mxu0 0.0
        %499 = vmatpush1.xpose.msra.mxu0 0.0
        %500 = vmatprep.subr.mxu0 0.0
        %501 = vmatpush1.xpose.msra.mxu0 0.0
        %502 = vmatprep.subr.mxu0 0.0
        %503 = vmatpush1.xpose.msra.mxu0 0.0
        %504 = vmatprep.subr.mxu0 0.0
        %505 = vmatpush1.xpose.msra.mxu0 0.0
        %506 = vmatprep.subr.mxu0 0.0
        %507 = vmatpush1.xpose.msra.mxu0 0.0
        %508 = vmatprep.subr.mxu0 0.0
        %509 = vmatpush1.xpose.msra.mxu0 0.0
        %510 = vmatprep.subr.mxu0 0.0
        %511 = vmatpush1.xpose.msra.mxu0 0.0
        %512 = vmatprep.subr.mxu0 0.0
        %513 = vmatpush1.xpose.msra.mxu0 0.0
        %514 = vmatprep.subr.mxu0 0.0
        %515 = vmatpush1.xpose.msra.mxu0 0.0
        %516 = vmatprep.subr.mxu0 0.0
        %517 = vmatpush1.xpose.msra.mxu0 0.0
        %518 = vmatprep.subr.mxu0 0.0
        %519 = vmatpush1.xpose.msra.mxu0 0.0
        %520 = vmatprep.subr.mxu0 0.0
        %521 = vmatpush1.xpose.msra.mxu0 0.0
        %522 = vmatprep.subr.mxu0 0.0
        %523 = vmatpush1.xpose.msra.mxu0 0.0
        %524 = vmatprep.subr.mxu0 0.0
        %525 = vmatpush1.xpose.msra.mxu0 0.0
        %526 = vmatprep.subr.mxu0 0.0
        %527 = vmatpush1.xpose.msra.mxu0 0.0
        %528 = vmatprep.subr.mxu0 0.0
        %529 = vmatpush1.xpose.msra.mxu0 0.0
        %530 = vmatprep.subr.mxu0 0.0
        %531 = vmatpush1.xpose.msra.mxu0 0.0
        %532 = vmatprep.subr.mxu0 0.0
        %533 = vmatpush1.xpose.msra.mxu0 0.0
        %534 = vmatprep.subr.mxu0 0.0
        %535 = vmatpush1.xpose.msra.mxu0 0.0
        %536 = vmatprep.subr.mxu0 0.0
        %537 = vmatpush1.xpose.msra.mxu0 0.0
        %538 = vmatprep.subr.mxu0 0.0
        %539 = vmatpush1.xpose.msra.mxu0 0.0
        %540 = vmatprep.subr.mxu0 0.0
        %541 = vmatpush1.xpose.msra.mxu0 0.0
        %542 = vmatprep.subr.mxu0 0.0
        %543 = vmatpush1.xpose.msra.mxu0 0.0
        %544 = vmatprep.subr.mxu0 0.0
        %545 = vmatpush1.xpose.msra.mxu0 0.0
        %546 = vmatprep.subr.mxu0 0.0
        %547 = vmatpush1.xpose.msra.mxu0 0.0
        %548 = vmatprep.subr.mxu0 0.0
        %549 = vmatpush1.xpose.msra.mxu0 0.0
        %550 = vmatprep.subr.mxu0 0.0
        %551 = vmatpush1.xpose.msra.mxu0 0.0
        %552 = vmatprep.subr.mxu0 0.0
        %553 = vmatpush1.xpose.msra.mxu0 0.0
        %554 = vmatprep.subr.mxu0 0.0
        %555 = vmatpush1.xpose.msra.mxu0 0.0
        %556 = vmatprep.subr.mxu0 0.0
        %557 = vmatpush1.xpose.msra.mxu0 0.0
        %558 = vmatprep.subr.mxu0 0.0
        %559 = vmatpush1.xpose.msra.mxu0 0.0
        %560 = vmatprep.mubr.f32.mxu0 0.0
        %561 = vmatmul.mubr.f32.gmra.mrb[0].mxu0 %v492
        %v562 = vpop.f32.mrb[0].mxu0
        %v563 = vadd.f32 0.0, %v562
        %v564 = vpop.f32.mrb[0].mxu0
        %565 = vdwg.mxu0
        %v566 = vsel %vm399, %v563, -inf
        %567 = vmax.xlane.f32.xlu0 %v566
        %v568 = vpop.xlane.xlu0 %567
        %v569 = vsub.f32 %v563, %v568
        %v570 = vmul.f32 %v569, 1.442695
        %v571 = vpow.pop %v570
        %v572 = vsel %vm399, %v571, 0.0
        %573 = vadd.xlane.f32.xlu0 %v572
        %v574 = vpop.xlane.xlu0 %573
        %v575 = vrcp.pop %v574
        %v576 = vmul.f32 %v571, %v575
        %577 = vrot.lane.b32.xlu0 %v318, 60
        %v578 = vpop.permute.xlu0 %577
        %v581 = vsel %vm399, %v576, 0
        %583 = vmatprep.subr.mxu0 0.0
        %584 = vmatpush1.msra.mxu0 %v578
        %585 = vmatprep.subr.mxu0 0.0
        %586 = vmatpush1.msra.mxu0 0.0
        %587 = vmatprep.subr.mxu0 0.0
        %588 = vmatpush1.msra.mxu0 0.0
        %589 = vmatprep.subr.mxu0 0.0
        %590 = vmatpush1.msra.mxu0 0.0
        %591 = vmatprep.subr.mxu0 0.0
        %592 = vmatpush1.msra.mxu0 0.0
        %593 = vmatprep.subr.mxu0 0.0
        %594 = vmatpush1.msra.mxu0 0.0
        %595 = vmatprep.subr.mxu0 0.0
        %596 = vmatpush1.msra.mxu0 0.0
        %597 = vmatprep.subr.mxu0 0.0
        %598 = vmatpush1.msra.mxu0 0.0
        %599 = vmatprep.subr.mxu0 0.0
        %600 = vmatpush1.msra.mxu0 0.0
        %601 = vmatprep.subr.mxu0 0.0
        %602 = vmatpush1.msra.mxu0 0.0
        %603 = vmatprep.subr.mxu0 0.0
        %604 = vmatpush1.msra.mxu0 0.0
        %605 = vmatprep.subr.mxu0 0.0
        %606 = vmatpush1.msra.mxu0 0.0
        %607 = vmatprep.subr.mxu0 0.0
        %608 = vmatpush1.msra.mxu0 0.0
        %609 = vmatprep.subr.mxu0 0.0
        %610 = vmatpush1.msra.mxu0 0.0
        %611 = vmatprep.subr.mxu0 0.0
        %612 = vmatpush1.msra.mxu0 0.0
        %613 = vmatprep.subr.mxu0 0.0
        %614 = vmatpush1.msra.mxu0 0.0
        %615 = vmatprep.subr.mxu0 0.0
        %616 = vmatpush1.msra.mxu0 0.0
        %617 = vmatprep.subr.mxu0 0.0
        %618 = vmatpush1.msra.mxu0 0.0
        %619 = vmatprep.subr.mxu0 0.0
        %620 = vmatpush1.msra.mxu0 0.0
        %621 = vmatprep.subr.mxu0 0.0
        %622 = vmatpush1.msra.mxu0 0.0
        %623 = vmatprep.subr.mxu0 0.0
        %624 = vmatpush1.msra.mxu0 0.0
        %625 = vmatprep.subr.mxu0 0.0
        %626 = vmatpush1.msra.mxu0 0.0
        %627 = vmatprep.subr.mxu0 0.0
        %628 = vmatpush1.msra.mxu0 0.0
        %629 = vmatprep.subr.mxu0 0.0
        %630 = vmatpush1.msra.mxu0 0.0
        %631 = vmatprep.subr.mxu0 0.0
        %632 = vmatpush1.msra.mxu0 0.0
        %633 = vmatprep.subr.mxu0 0.0
        %634 = vmatpush1.msra.mxu0 0.0
        %635 = vmatprep.subr.mxu0 0.0
        %636 = vmatpush1.msra.mxu0 0.0
        %637 = vmatprep.subr.mxu0 0.0
        %638 = vmatpush1.msra.mxu0 0.0
        %639 = vmatprep.subr.mxu0 0.0
        %640 = vmatpush1.msra.mxu0 0.0
        %641 = vmatprep.subr.mxu0 0.0
        %642 = vmatpush1.msra.mxu0 0.0
        %643 = vmatprep.subr.mxu0 0.0
        %644 = vmatpush1.msra.mxu0 0.0
        %645 = vmatprep.subr.mxu0 0.0
        %646 = vmatpush1.msra.mxu0 0.0
        %647 = vmatprep.mubr.f32.mxu0 0.0
        %648 = vmatmul.mubr.f32.gmra.mrb[0].mxu0 %v581
        %v649 = vpop.f32.mrb[0].mxu0
        %v650 = vadd.f32 0.0, %v649
        %v651 = vpop.f32.mrb[0].mxu0
        %652 = vdwg.mxu0
        %v653 = vld [vmem:[#allocation7 + $0x4] sm:$0xf]
        %v655 = vsel %vm324, %v650, 0
        %vm657 = vcmask 1043456
        %v659 = vsel %vm657, %v653, 0
        %661 = vmatprep.subr.mxu0 0.0
        %662 = vmatpush1.msra.mxu0 %v659
        %663 = vmatprep.subr.mxu0 0.0
        %664 = vmatpush1.msra.mxu0 0.0
        %665 = vmatprep.subr.mxu0 0.0
        %666 = vmatpush1.msra.mxu0 0.0
        %667 = vmatprep.subr.mxu0 0.0
        %668 = vmatpush1.msra.mxu0 0.0
        %669 = vmatprep.subr.mxu0 0.0
        %670 = vmatpush1.msra.mxu0 0.0
        %671 = vmatprep.subr.mxu0 0.0
        %672 = vmatpush1.msra.mxu0 0.0
        %673 = vmatprep.subr.mxu0 0.0
        %674 = vmatpush1.msra.mxu0 0.0
        %675 = vmatprep.subr.mxu0 0.0
        %676 = vmatpush1.msra.mxu0 0.0
        %677 = vmatprep.subr.mxu0 0.0
        %678 = vmatpush1.msra.mxu0 0.0
        %679 = vmatprep.subr.mxu0 0.0
        %680 = vmatpush1.msra.mxu0 0.0
        %681 = vmatprep.subr.mxu0 0.0
        %682 = vmatpush1.msra.mxu0 0.0
        %683 = vmatprep.subr.mxu0 0.0
        %684 = vmatpush1.msra.mxu0 0.0
        %685 = vmatprep.subr.mxu0 0.0
        %686 = vmatpush1.msra.mxu0 0.0
        %687 = vmatprep.subr.mxu0 0.0
        %688 = vmatpush1.msra.mxu0 0.0
        %689 = vmatprep.subr.mxu0 0.0
        %690 = vmatpush1.msra.mxu0 0.0
        %691 = vmatprep.subr.mxu0 0.0
        %692 = vmatpush1.msra.mxu0 0.0
        %693 = vmatprep.subr.mxu0 0.0
        %694 = vmatpush1.msra.mxu0 0.0
        %695 = vmatprep.subr.mxu0 0.0
        %696 = vmatpush1.msra.mxu0 0.0
        %697 = vmatprep.subr.mxu0 0.0
        %698 = vmatpush1.msra.mxu0 0.0
        %699 = vmatprep.subr.mxu0 0.0
        %700 = vmatpush1.msra.mxu0 0.0
        %701 = vmatprep.subr.mxu0 0.0
        %702 = vmatpush1.msra.mxu0 0.0
        %703 = vmatprep.subr.mxu0 0.0
        %704 = vmatpush1.msra.mxu0 0.0
        %705 = vmatprep.subr.mxu0 0.0
        %706 = vmatpush1.msra.mxu0 0.0
        %707 = vmatprep.subr.mxu0 0.0
        %708 = vmatpush1.msra.mxu0 0.0
        %709 = vmatprep.subr.mxu0 0.0
        %710 = vmatpush1.msra.mxu0 0.0
        %711 = vmatprep.subr.mxu0 0.0
        %712 = vmatpush1.msra.mxu0 0.0
        %713 = vmatprep.subr.mxu0 0.0
        %714 = vmatpush1.msra.mxu0 0.0
        %715 = vmatprep.subr.mxu0 0.0
        %716 = vmatpush1.msra.mxu0 0.0
        %717 = vmatprep.subr.mxu0 0.0
        %718 = vmatpush1.msra.mxu0 0.0
        %719 = vmatprep.subr.mxu0 0.0
        %720 = vmatpush1.msra.mxu0 0.0
        %721 = vmatprep.subr.mxu0 0.0
        %722 = vmatpush1.msra.mxu0 0.0
        %723 = vmatprep.subr.mxu0 0.0
        %724 = vmatpush1.msra.mxu0 0.0
        %725 = vmatprep.mubr.f32.mxu0 0.0
        %726 = vmatmul.mubr.f32.gmra.mrb[0].mxu0 %v655
        %v727 = vpop.f32.mrb[0].mxu0
        %v728 = vadd.f32 0.0, %v727
        %v729 = vpop.f32.mrb[0].mxu0
        %730 = vdwg.mxu0
        %v732 = vsel %vm324, %v484, 0
        %v735 = vsel %vm657, %v487, 0
        %737 = vmatprep.subr.mxu0 0.0
        %738 = vmatpush1.msra.mxu0 %v735
        %739 = vmatprep.subr.mxu0 0.0
        %740 = vmatpush1.msra.mxu0 0.0
        %741 = vmatprep.subr.mxu0 0.0
        %742 = vmatpush1.msra.mxu0 0.0
        %743 = vmatprep.subr.mxu0 0.0
        %744 = vmatpush1.msra.mxu0 0.0
        %745 = vmatprep.subr.mxu0 0.0
        %746 = vmatpush1.msra.mxu0 0.0
        %747 = vmatprep.subr.mxu0 0.0
        %748 = vmatpush1.msra.mxu0 0.0
        %749 = vmatprep.subr.mxu0 0.0
        %750 = vmatpush1.msra.mxu0 0.0
        %751 = vmatprep.subr.mxu0 0.0
        %752 = vmatpush1.msra.mxu0 0.0
        %753 = vmatprep.subr.mxu0 0.0
        %754 = vmatpush1.msra.mxu0 0.0
        %755 = vmatprep.subr.mxu0 0.0
        %756 = vmatpush1.msra.mxu0 0.0
        %757 = vmatprep.subr.mxu0 0.0
        %758 = vmatpush1.msra.mxu0 0.0
        %759 = vmatprep.subr.mxu0 0.0
        %760 = vmatpush1.msra.mxu0 0.0
        %761 = vmatprep.subr.mxu0 0.0
        %762 = vmatpush1.msra.mxu0 0.0
        %763 = vmatprep.subr.mxu0 0.0
        %764 = vmatpush1.msra.mxu0 0.0
        %765 = vmatprep.subr.mxu0 0.0
        %766 = vmatpush1.msra.mxu0 0.0
        %767 = vmatprep.subr.mxu0 0.0
        %768 = vmatpush1.msra.mxu0 0.0
        %769 = vmatprep.subr.mxu0 0.0
        %770 = vmatpush1.msra.mxu0 0.0
        %771 = vmatprep.subr.mxu0 0.0
        %772 = vmatpush1.msra.mxu0 0.0
        %773 = vmatprep.subr.mxu0 0.0
        %774 = vmatpush1.msra.mxu0 0.0
        %775 = vmatprep.subr.mxu0 0.0
        %776 = vmatpush1.msra.mxu0 0.0
        %777 = vmatprep.subr.mxu0 0.0
        %778 = vmatpush1.msra.mxu0 0.0
        %779 = vmatprep.subr.mxu0 0.0
        %780 = vmatpush1.msra.mxu0 0.0
        %781 = vmatprep.subr.mxu0 0.0
        %782 = vmatpush1.msra.mxu0 0.0
        %783 = vmatprep.subr.mxu0 0.0
        %784 = vmatpush1.msra.mxu0 0.0
        %785 = vmatprep.subr.mxu0 0.0
        %786 = vmatpush1.msra.mxu0 0.0
        %787 = vmatprep.subr.mxu0 0.0
        %788 = vmatpush1.msra.mxu0 0.0
        %789 = vmatprep.subr.mxu0 0.0
        %790 = vmatpush1.msra.mxu0 0.0
        %791 = vmatprep.subr.mxu0 0.0
        %792 = vmatpush1.msra.mxu0 0.0
        %793 = vmatprep.subr.mxu0 0.0
        %794 = vmatpush1.msra.mxu0 0.0
        %795 = vmatprep.subr.mxu0 0.0
        %796 = vmatpush1.msra.mxu0 0.0
        %797 = vmatprep.subr.mxu0 0.0
        %798 = vmatpush1.msra.mxu0 0.0
        %799 = vmatprep.subr.mxu0 0.0
        %800 = vmatpush1.msra.mxu0 0.0
        %801 = vmatprep.mubr.f32.mxu0 0.0
        %802 = vmatmul.mubr.f32.gmra.mrb[0].mxu0 %v732
        %v803 = vpop.f32.mrb[0].mxu0
        %v804 = vadd.f32 %v728, %v803
        %v805 = vpop.f32.mrb[0].mxu0
        %806 = vdwg.mxu0
        %807 = vrot.lane.b32.xlu0 %v318, 120
        %v808 = vpop.permute.xlu0 %807
        %809 = vrot.lane.b32.xlu0 %v318, 88
        %v810 = vpop.permute.xlu0 %809
        %v811 = vsel %vm324, %v808, 0
        %v813 = vsel %vm324, %v810, 0
        %815 = vmatprep.subr.mxu0 0.0
        %816 = vmatpush1.xpose.msra.mxu0 %v813
        %817 = vmatprep.subr.mxu0 0.0
        %818 = vmatpush1.xpose.msra.mxu0 0.0
        %819 = vmatprep.subr.mxu0 0.0
        %820 = vmatpush1.xpose.msra.mxu0 0.0
        %821 = vmatprep.subr.mxu0 0.0
        %822 = vmatpush1.xpose.msra.mxu0 0.0
        %823 = vmatprep.subr.mxu0 0.0
        %824 = vmatpush1.xpose.msra.mxu0 0.0
        %825 = vmatprep.subr.mxu0 0.0
        %826 = vmatpush1.xpose.msra.mxu0 0.0
        %827 = vmatprep.subr.mxu0 0.0
        %828 = vmatpush1.xpose.msra.mxu0 0.0
        %829 = vmatprep.subr.mxu0 0.0
        %830 = vmatpush1.xpose.msra.mxu0 0.0
        %831 = vmatprep.subr.mxu0 0.0
        %832 = vmatpush1.xpose.msra.mxu0 0.0
        %833 = vmatprep.subr.mxu0 0.0
        %834 = vmatpush1.xpose.msra.mxu0 0.0
        %835 = vmatprep.subr.mxu0 0.0
        %836 = vmatpush1.xpose.msra.mxu0 0.0
        %837 = vmatprep.subr.mxu0 0.0
        %838 = vmatpush1.xpose.msra.mxu0 0.0
        %839 = vmatprep.subr.mxu0 0.0
        %840 = vmatpush1.xpose.msra.mxu0 0.0
        %841 = vmatprep.subr.mxu0 0.0
        %842 = vmatpush1.xpose.msra.mxu0 0.0
        %843 = vmatprep.subr.mxu0 0.0
        %844 = vmatpush1.xpose.msra.mxu0 0.0
        %845 = vmatprep.subr.mxu0 0.0
        %846 = vmatpush1.xpose.msra.mxu0 0.0
        %847 = vmatprep.subr.mxu0 0.0
        %848 = vmatpush1.xpose.msra.mxu0 0.0
        %849 = vmatprep.subr.mxu0 0.0
        %850 = vmatpush1.xpose.msra.mxu0 0.0
        %851 = vmatprep.subr.mxu0 0.0
        %852 = vmatpush1.xpose.msra.mxu0 0.0
        %853 = vmatprep.subr.mxu0 0.0
        %854 = vmatpush1.xpose.msra.mxu0 0.0
        %855 = vmatprep.subr.mxu0 0.0
        %856 = vmatpush1.xpose.msra.mxu0 0.0
        %857 = vmatprep.subr.mxu0 0.0
        %858 = vmatpush1.xpose.msra.mxu0 0.0
        %859 = vmatprep.subr.mxu0 0.0
        %860 = vmatpush1.xpose.msra.mxu0 0.0
        %861 = vmatprep.subr.mxu0 0.0
        %862 = vmatpush1.xpose.msra.mxu0 0.0
        %863 = vmatprep.subr.mxu0 0.0
        %864 = vmatpush1.xpose.msra.mxu0 0.0
        %865 = vmatprep.subr.mxu0 0.0
        %866 = vmatpush1.xpose.msra.mxu0 0.0
        %867 = vmatprep.subr.mxu0 0.0
        %868 = vmatpush1.xpose.msra.mxu0 0.0
        %869 = vmatprep.subr.mxu0 0.0
        %870 = vmatpush1.xpose.msra.mxu0 0.0
        %871 = vmatprep.subr.mxu0 0.0
        %872 = vmatpush1.xpose.msra.mxu0 0.0
        %873 = vmatprep.subr.mxu0 0.0
        %874 = vmatpush1.xpose.msra.mxu0 0.0
        %875 = vmatprep.subr.mxu0 0.0
        %876 = vmatpush1.xpose.msra.mxu0 0.0
        %877 = vmatprep.subr.mxu0 0.0
        %878 = vmatpush1.xpose.msra.mxu0 0.0
        %879 = vmatprep.mubr.f32.mxu0 0.0
        %880 = vmatmul.mubr.f32.gmra.mrb[0].mxu0 %v811
        %v881 = vpop.f32.mrb[0].mxu0
        %v882 = vadd.f32 0.0, %v881
        %v883 = vpop.f32.mrb[0].mxu0
        %884 = vdwg.mxu0
        %v885 = vsel %vm399, %v882, -inf
        %886 = vmax.xlane.f32.xlu0 %v885
        %v887 = vpop.xlane.xlu0 %886
        %v888 = vsub.f32 %v882, %v887
        %v889 = vmul.f32 %v888, 1.442695
        %v890 = vpow.pop %v889
        %v891 = vsel %vm399, %v890, 0.0
        %892 = vadd.xlane.f32.xlu0 %v891
        %v893 = vpop.xlane.xlu0 %892
        %v894 = vrcp.pop %v893
        %v895 = vmul.f32 %v890, %v894
        %896 = vrot.lane.b32.xlu0 %v318, 56
        %v897 = vpop.permute.xlu0 %896
        %v900 = vsel %vm399, %v895, 0
        %902 = vmatprep.subr.mxu0 0.0
        %903 = vmatpush1.msra.mxu0 %v897
        %904 = vmatprep.subr.mxu0 0.0
        %905 = vmatpush1.msra.mxu0 0.0
        %906 = vmatprep.subr.mxu0 0.0
        %907 = vmatpush1.msra.mxu0 0.0
        %908 = vmatprep.subr.mxu0 0.0
        %909 = vmatpush1.msra.mxu0 0.0
        %910 = vmatprep.subr.mxu0 0.0
        %911 = vmatpush1.msra.mxu0 0.0
        %912 = vmatprep.subr.mxu0 0.0
        %913 = vmatpush1.msra.mxu0 0.0
        %914 = vmatprep.subr.mxu0 0.0
        %915 = vmatpush1.msra.mxu0 0.0
        %916 = vmatprep.subr.mxu0 0.0
        %917 = vmatpush1.msra.mxu0 0.0
        %918 = vmatprep.subr.mxu0 0.0
        %919 = vmatpush1.msra.mxu0 0.0
        %920 = vmatprep.subr.mxu0 0.0
        %921 = vmatpush1.msra.mxu0 0.0
        %922 = vmatprep.subr.mxu0 0.0
        %923 = vmatpush1.msra.mxu0 0.0
        %924 = vmatprep.subr.mxu0 0.0
        %925 = vmatpush1.msra.mxu0 0.0
        %926 = vmatprep.subr.mxu0 0.0
        %927 = vmatpush1.msra.mxu0 0.0
        %928 = vmatprep.subr.mxu0 0.0
        %929 = vmatpush1.msra.mxu0 0.0
        %930 = vmatprep.subr.mxu0 0.0
        %931 = vmatpush1.msra.mxu0 0.0
        %932 = vmatprep.subr.mxu0 0.0
        %933 = vmatpush1.msra.mxu0 0.0
        %934 = vmatprep.subr.mxu0 0.0
        %935 = vmatpush1.msra.mxu0 0.0
        %936 = vmatprep.subr.mxu0 0.0
        %937 = vmatpush1.msra.mxu0 0.0
        %938 = vmatprep.subr.mxu0 0.0
        %939 = vmatpush1.msra.mxu0 0.0
        %940 = vmatprep.subr.mxu0 0.0
        %941 = vmatpush1.msra.mxu0 0.0
        %942 = vmatprep.subr.mxu0 0.0
        %943 = vmatpush1.msra.mxu0 0.0
        %944 = vmatprep.subr.mxu0 0.0
        %945 = vmatpush1.msra.mxu0 0.0
        %946 = vmatprep.subr.mxu0 0.0
        %947 = vmatpush1.msra.mxu0 0.0
        %948 = vmatprep.subr.mxu0 0.0
        %949 = vmatpush1.msra.mxu0 0.0
        %950 = vmatprep.subr.mxu0 0.0
        %951 = vmatpush1.msra.mxu0 0.0
        %952 = vmatprep.subr.mxu0 0.0
        %953 = vmatpush1.msra.mxu0 0.0
        %954 = vmatprep.subr.mxu0 0.0
        %955 = vmatpush1.msra.mxu0 0.0
        %956 = vmatprep.subr.mxu0 0.0
        %957 = vmatpush1.msra.mxu0 0.0
        %958 = vmatprep.subr.mxu0 0.0
        %959 = vmatpush1.msra.mxu0 0.0
        %960 = vmatprep.subr.mxu0 0.0
        %961 = vmatpush1.msra.mxu0 0.0
        %962 = vmatprep.subr.mxu0 0.0
        %963 = vmatpush1.msra.mxu0 0.0
        %964 = vmatprep.subr.mxu0 0.0
        %965 = vmatpush1.msra.mxu0 0.0
        %966 = vmatprep.mubr.f32.mxu0 0.0
        %967 = vmatmul.mubr.f32.gmra.mrb[0].mxu0 %v900
        %v968 = vpop.f32.mrb[0].mxu0
        %v969 = vadd.f32 0.0, %v968
        %v970 = vpop.f32.mrb[0].mxu0
        %971 = vdwg.mxu0
        %v972 = vld [vmem:[#allocation7 + $0x8] sm:$0xf]
        %v974 = vsel %vm324, %v969, 0
        %v977 = vsel %vm657, %v972, 0
        %979 = vmatprep.subr.mxu0 0.0
        %980 = vmatpush1.msra.mxu0 %v977
        %981 = vmatprep.subr.mxu0 0.0
        %982 = vmatpush1.msra.mxu0 0.0
        %983 = vmatprep.subr.mxu0 0.0
        %984 = vmatpush1.msra.mxu0 0.0
        %985 = vmatprep.subr.mxu0 0.0
        %986 = vmatpush1.msra.mxu0 0.0
        %987 = vmatprep.subr.mxu0 0.0
        %988 = vmatpush1.msra.mxu0 0.0
        %989 = vmatprep.subr.mxu0 0.0
        %990 = vmatpush1.msra.mxu0 0.0
        %991 = vmatprep.subr.mxu0 0.0
        %992 = vmatpush1.msra.mxu0 0.0
        %993 = vmatprep.subr.mxu0 0.0
        %994 = vmatpush1.msra.mxu0 0.0
        %995 = vmatprep.subr.mxu0 0.0
        %996 = vmatpush1.msra.mxu0 0.0
        %997 = vmatprep.subr.mxu0 0.0
        %998 = vmatpush1.msra.mxu0 0.0
        %999 = vmatprep.subr.mxu0 0.0
        %1000 = vmatpush1.msra.mxu0 0.0
        %1001 = vmatprep.subr.mxu0 0.0
        %1002 = vmatpush1.msra.mxu0 0.0
        %1003 = vmatprep.subr.mxu0 0.0
        %1004 = vmatpush1.msra.mxu0 0.0
        %1005 = vmatprep.subr.mxu0 0.0
        %1006 = vmatpush1.msra.mxu0 0.0
        %1007 = vmatprep.subr.mxu0 0.0
        %1008 = vmatpush1.msra.mxu0 0.0
        %1009 = vmatprep.subr.mxu0 0.0
        %1010 = vmatpush1.msra.mxu0 0.0
        %1011 = vmatprep.subr.mxu0 0.0
        %1012 = vmatpush1.msra.mxu0 0.0
        %1013 = vmatprep.subr.mxu0 0.0
        %1014 = vmatpush1.msra.mxu0 0.0
        %1015 = vmatprep.subr.mxu0 0.0
        %1016 = vmatpush1.msra.mxu0 0.0
        %1017 = vmatprep.subr.mxu0 0.0
        %1018 = vmatpush1.msra.mxu0 0.0
        %1019 = vmatprep.subr.mxu0 0.0
        %1020 = vmatpush1.msra.mxu0 0.0
        %1021 = vmatprep.subr.mxu0 0.0
        %1022 = vmatpush1.msra.mxu0 0.0
        %1023 = vmatprep.subr.mxu0 0.0
        %1024 = vmatpush1.msra.mxu0 0.0
        %1025 = vmatprep.subr.mxu0 0.0
        %1026 = vmatpush1.msra.mxu0 0.0
        %1027 = vmatprep.subr.mxu0 0.0
        %1028 = vmatpush1.msra.mxu0 0.0
        %1029 = vmatprep.subr.mxu0 0.0
        %1030 = vmatpush1.msra.mxu0 0.0
        %1031 = vmatprep.subr.mxu0 0.0
        %1032 = vmatpush1.msra.mxu0 0.0
        %1033 = vmatprep.subr.mxu0 0.0
        %1034 = vmatpush1.msra.mxu0 0.0
        %1035 = vmatprep.subr.mxu0 0.0
        %1036 = vmatpush1.msra.mxu0 0.0
        %1037 = vmatprep.subr.mxu0 0.0
        %1038 = vmatpush1.msra.mxu0 0.0
        %1039 = vmatprep.subr.mxu0 0.0
        %1040 = vmatpush1.msra.mxu0 0.0
        %1041 = vmatprep.subr.mxu0 0.0
        %1042 = vmatpush1.msra.mxu0 0.0
        %1043 = vmatprep.mubr.f32.mxu0 0.0
        %1044 = vmatmul.mubr.f32.gmra.mrb[0].mxu0 %v974
        %v1045 = vpop.f32.mrb[0].mxu0
        %v1046 = vadd.f32 0.0, %v1045
        %v1047 = vpop.f32.mrb[0].mxu0
        %1048 = vdwg.mxu0
        %v1049 = vadd.f32 %v804, %v1046
        %1050 = vrot.lane.b32.xlu0 %v318, 116
        %v1051 = vpop.permute.xlu0 %1050
        %1052 = vrot.lane.b32.xlu0 %v318, 84
        %v1053 = vpop.permute.xlu0 %1052
        %v1054 = vsel %vm324, %v1051, 0
        %v1056 = vsel %vm324, %v1053, 0
        %1058 = vmatprep.subr.mxu0 0.0
        %1059 = vmatpush1.xpose.msra.mxu0 %v1056
        %1060 = vmatprep.subr.mxu0 0.0
        %1061 = vmatpush1.xpose.msra.mxu0 0.0
        %1062 = vmatprep.subr.mxu0 0.0
        %1063 = vmatpush1.xpose.msra.mxu0 0.0
        %1064 = vmatprep.subr.mxu0 0.0
        %1065 = vmatpush1.xpose.msra.mxu0 0.0
        %1066 = vmatprep.subr.mxu0 0.0
        %1067 = vmatpush1.xpose.msra.mxu0 0.0
        %1068 = vmatprep.subr.mxu0 0.0
        %1069 = vmatpush1.xpose.msra.mxu0 0.0
        %1070 = vmatprep.subr.mxu0 0.0
        %1071 = vmatpush1.xpose.msra.mxu0 0.0
        %1072 = vmatprep.subr.mxu0 0.0
        %1073 = vmatpush1.xpose.msra.mxu0 0.0
        %1074 = vmatprep.subr.mxu0 0.0
        %1075 = vmatpush1.xpose.msra.mxu0 0.0
        %1076 = vmatprep.subr.mxu0 0.0
        %1077 = vmatpush1.xpose.msra.mxu0 0.0
        %1078 = vmatprep.subr.mxu0 0.0
        %1079 = vmatpush1.xpose.msra.mxu0 0.0
        %1080 = vmatprep.subr.mxu0 0.0
        %1081 = vmatpush1.xpose.msra.mxu0 0.0
        %1082 = vmatprep.subr.mxu0 0.0
        %1083 = vmatpush1.xpose.msra.mxu0 0.0
        %1084 = vmatprep.subr.mxu0 0.0
        %1085 = vmatpush1.xpose.msra.mxu0 0.0
        %1086 = vmatprep.subr.mxu0 0.0
        %1087 = vmatpush1.xpose.msra.mxu0 0.0
        %1088 = vmatprep.subr.mxu0 0.0
        %1089 = vmatpush1.xpose.msra.mxu0 0.0
        %1090 = vmatprep.subr.mxu0 0.0
        %1091 = vmatpush1.xpose.msra.mxu0 0.0
        %1092 = vmatprep.subr.mxu0 0.0
        %1093 = vmatpush1.xpose.msra.mxu0 0.0
        %1094 = vmatprep.subr.mxu0 0.0
        %1095 = vmatpush1.xpose.msra.mxu0 0.0
        %1096 = vmatprep.subr.mxu0 0.0
        %1097 = vmatpush1.xpose.msra.mxu0 0.0
        %1098 = vmatprep.subr.mxu0 0.0
        %1099 = vmatpush1.xpose.msra.mxu0 0.0
        %1100 = vmatprep.subr.mxu0 0.0
        %1101 = vmatpush1.xpose.msra.mxu0 0.0
        %1102 = vmatprep.subr.mxu0 0.0
        %1103 = vmatpush1.xpose.msra.mxu0 0.0
        %1104 = vmatprep.subr.mxu0 0.0
        %1105 = vmatpush1.xpose.msra.mxu0 0.0
        %1106 = vmatprep.subr.mxu0 0.0
        %1107 = vmatpush1.xpose.msra.mxu0 0.0
        %1108 = vmatprep.subr.mxu0 0.0
        %1109 = vmatpush1.xpose.msra.mxu0 0.0
        %1110 = vmatprep.subr.mxu0 0.0
        %1111 = vmatpush1.xpose.msra.mxu0 0.0
        %1112 = vmatprep.subr.mxu0 0.0
        %1113 = vmatpush1.xpose.msra.mxu0 0.0
        %1114 = vmatprep.subr.mxu0 0.0
        %1115 = vmatpush1.xpose.msra.mxu0 0.0
        %1116 = vmatprep.subr.mxu0 0.0
        %1117 = vmatpush1.xpose.msra.mxu0 0.0
        %1118 = vmatprep.subr.mxu0 0.0
        %1119 = vmatpush1.xpose.msra.mxu0 0.0
        %1120 = vmatprep.subr.mxu0 0.0
        %1121 = vmatpush1.xpose.msra.mxu0 0.0
        %1122 = vmatprep.mubr.f32.mxu0 0.0
        %1123 = vmatmul.mubr.f32.gmra.mrb[0].mxu0 %v1054
        %v1124 = vpop.f32.mrb[0].mxu0
        %v1125 = vadd.f32 0.0, %v1124
        %v1126 = vpop.f32.mrb[0].mxu0
        %1127 = vdwg.mxu0
        %v1128 = vsel %vm399, %v1125, -inf
        %1129 = vmax.xlane.f32.xlu0 %v1128
        %v1130 = vpop.xlane.xlu0 %1129
        %v1131 = vsub.f32 %v1125, %v1130
        %v1132 = vmul.f32 %v1131, 1.442695
        %v1133 = vpow.pop %v1132
        %v1134 = vsel %vm399, %v1133, 0.0
        %1135 = vadd.xlane.f32.xlu0 %v1134
        %v1136 = vpop.xlane.xlu0 %1135
        %v1137 = vrcp.pop %v1136
        %v1138 = vmul.f32 %v1133, %v1137
        %1139 = vrot.lane.b32.xlu0 %v318, 52
        %v1140 = vpop.permute.xlu0 %1139
        %v1143 = vsel %vm399, %v1138, 0
        %1145 = vmatprep.subr.mxu0 0.0
        %1146 = vmatpush1.msra.mxu0 %v1140
        %1147 = vmatprep.subr.mxu0 0.0
        %1148 = vmatpush1.msra.mxu0 0.0
        %1149 = vmatprep.subr.mxu0 0.0
        %1150 = vmatpush1.msra.mxu0 0.0
        %1151 = vmatprep.subr.mxu0 0.0
        %1152 = vmatpush1.msra.mxu0 0.0
        %1153 = vmatprep.subr.mxu0 0.0
        %1154 = vmatpush1.msra.mxu0 0.0
        %1155 = vmatprep.subr.mxu0 0.0
        %1156 = vmatpush1.msra.mxu0 0.0
        %1157 = vmatprep.subr.mxu0 0.0
        %1158 = vmatpush1.msra.mxu0 0.0
        %1159 = vmatprep.subr.mxu0 0.0
        %1160 = vmatpush1.msra.mxu0 0.0
        %1161 = vmatprep.subr.mxu0 0.0
        %1162 = vmatpush1.msra.mxu0 0.0
        %1163 = vmatprep.subr.mxu0 0.0
        %1164 = vmatpush1.msra.mxu0 0.0
        %1165 = vmatprep.subr.mxu0 0.0
        %1166 = vmatpush1.msra.mxu0 0.0
        %1167 = vmatprep.subr.mxu0 0.0
        %1168 = vmatpush1.msra.mxu0 0.0
        %1169 = vmatprep.subr.mxu0 0.0
        %1170 = vmatpush1.msra.mxu0 0.0
        %1171 = vmatprep.subr.mxu0 0.0
        %1172 = vmatpush1.msra.mxu0 0.0
        %1173 = vmatprep.subr.mxu0 0.0
        %1174 = vmatpush1.msra.mxu0 0.0
        %1175 = vmatprep.subr.mxu0 0.0
        %1176 = vmatpush1.msra.mxu0 0.0
        %1177 = vmatprep.subr.mxu0 0.0
        %1178 = vmatpush1.msra.mxu0 0.0
        %1179 = vmatprep.subr.mxu0 0.0
        %1180 = vmatpush1.msra.mxu0 0.0
        %1181 = vmatprep.subr.mxu0 0.0
        %1182 = vmatpush1.msra.mxu0 0.0
        %1183 = vmatprep.subr.mxu0 0.0
        %1184 = vmatpush1.msra.mxu0 0.0
        %1185 = vmatprep.subr.mxu0 0.0
        %1186 = vmatpush1.msra.mxu0 0.0
        %1187 = vmatprep.subr.mxu0 0.0
        %1188 = vmatpush1.msra.mxu0 0.0
        %1189 = vmatprep.subr.mxu0 0.0
        %1190 = vmatpush1.msra.mxu0 0.0
        %1191 = vmatprep.subr.mxu0 0.0
        %1192 = vmatpush1.msra.mxu0 0.0
        %1193 = vmatprep.subr.mxu0 0.0
        %1194 = vmatpush1.msra.mxu0 0.0
        %1195 = vmatprep.subr.mxu0 0.0
        %1196 = vmatpush1.msra.mxu0 0.0
        %1197 = vmatprep.subr.mxu0 0.0
        %1198 = vmatpush1.msra.mxu0 0.0
        %1199 = vmatprep.subr.mxu0 0.0
        %1200 = vmatpush1.msra.mxu0 0.0
        %1201 = vmatprep.subr.mxu0 0.0
        %1202 = vmatpush1.msra.mxu0 0.0
        %1203 = vmatprep.subr.mxu0 0.0
        %1204 = vmatpush1.msra.mxu0 0.0
        %1205 = vmatprep.subr.mxu0 0.0
        %1206 = vmatpush1.msra.mxu0 0.0
        %1207 = vmatprep.subr.mxu0 0.0
        %1208 = vmatpush1.msra.mxu0 0.0
        %1209 = vmatprep.mubr.f32.mxu0 0.0
        %1210 = vmatmul.mubr.f32.gmra.mrb[0].mxu0 %v1143
        %v1211 = vpop.f32.mrb[0].mxu0
        %v1212 = vadd.f32 0.0, %v1211
        %v1213 = vpop.f32.mrb[0].mxu0
        %1214 = vdwg.mxu0
        %v1215 = vld [vmem:[#allocation7 + $0xc] sm:$0xf]
        %v1217 = vsel %vm324, %v1212, 0
        %v1220 = vsel %vm657, %v1215, 0
        %1222 = vmatprep.subr.mxu0 0.0
        %1223 = vmatpush1.msra.mxu0 %v1220
        %1224 = vmatprep.subr.mxu0 0.0
        %1225 = vmatpush1.msra.mxu0 0.0
        %1226 = vmatprep.subr.mxu0 0.0
        %1227 = vmatpush1.msra.mxu0 0.0
        %1228 = vmatprep.subr.mxu0 0.0
        %1229 = vmatpush1.msra.mxu0 0.0
        %1230 = vmatprep.subr.mxu0 0.0
        %1231 = vmatpush1.msra.mxu0 0.0
        %1232 = vmatprep.subr.mxu0 0.0
        %1233 = vmatpush1.msra.mxu0 0.0
        %1234 = vmatprep.subr.mxu0 0.0
        %1235 = vmatpush1.msra.mxu0 0.0
        %1236 = vmatprep.subr.mxu0 0.0
        %1237 = vmatpush1.msra.mxu0 0.0
        %1238 = vmatprep.subr.mxu0 0.0
        %1239 = vmatpush1.msra.mxu0 0.0
        %1240 = vmatprep.subr.mxu0 0.0
        %1241 = vmatpush1.msra.mxu0 0.0
        %1242 = vmatprep.subr.mxu0 0.0
        %1243 = vmatpush1.msra.mxu0 0.0
        %1244 = vmatprep.subr.mxu0 0.0
        %1245 = vmatpush1.msra.mxu0 0.0
        %1246 = vmatprep.subr.mxu0 0.0
        %1247 = vmatpush1.msra.mxu0 0.0
        %1248 = vmatprep.subr.mxu0 0.0
        %1249 = vmatpush1.msra.mxu0 0.0
        %1250 = vmatprep.subr.mxu0 0.0
        %1251 = vmatpush1.msra.mxu0 0.0
        %1252 = vmatprep.subr.mxu0 0.0
        %1253 = vmatpush1.msra.mxu0 0.0
        %1254 = vmatprep.subr.mxu0 0.0
        %1255 = vmatpush1.msra.mxu0 0.0
        %1256 = vmatprep.subr.mxu0 0.0
        %1257 = vmatpush1.msra.mxu0 0.0
        %1258 = vmatprep.subr.mxu0 0.0
        %1259 = vmatpush1.msra.mxu0 0.0
        %1260 = vmatprep.subr.mxu0 0.0
        %1261 = vmatpush1.msra.mxu0 0.0
        %1262 = vmatprep.subr.mxu0 0.0
        %1263 = vmatpush1.msra.mxu0 0.0
        %1264 = vmatprep.subr.mxu0 0.0
        %1265 = vmatpush1.msra.mxu0 0.0
        %1266 = vmatprep.subr.mxu0 0.0
        %1267 = vmatpush1.msra.mxu0 0.0
        %1268 = vmatprep.subr.mxu0 0.0
        %1269 = vmatpush1.msra.mxu0 0.0
        %1270 = vmatprep.subr.mxu0 0.0
        %1271 = vmatpush1.msra.mxu0 0.0
        %1272 = vmatprep.subr.mxu0 0.0
        %1273 = vmatpush1.msra.mxu0 0.0
        %1274 = vmatprep.subr.mxu0 0.0
        %1275 = vmatpush1.msra.mxu0 0.0
        %1276 = vmatprep.subr.mxu0 0.0
        %1277 = vmatpush1.msra.mxu0 0.0
        %1278 = vmatprep.subr.mxu0 0.0
        %1279 = vmatpush1.msra.mxu0 0.0
        %1280 = vmatprep.subr.mxu0 0.0
        %1281 = vmatpush1.msra.mxu0 0.0
        %1282 = vmatprep.subr.mxu0 0.0
        %1283 = vmatpush1.msra.mxu0 0.0
        %1284 = vmatprep.subr.mxu0 0.0
        %1285 = vmatpush1.msra.mxu0 0.0
        %1286 = vmatprep.mubr.f32.mxu0 0.0
        %1287 = vmatmul.mubr.f32.gmra.mrb[0].mxu0 %v1217
        %v1288 = vpop.f32.mrb[0].mxu0
        %v1289 = vadd.f32 0.0, %v1288
        %v1290 = vpop.f32.mrb[0].mxu0
        %1291 = vdwg.mxu0
        %v1292 = vadd.f32 %v1049, %v1289
        %1293 = vrot.lane.b32.xlu0 %v318, 112
        %v1294 = vpop.permute.xlu0 %1293
        %1295 = vrot.lane.b32.xlu0 %v318, 80
        %v1296 = vpop.permute.xlu0 %1295
        %v1297 = vsel %vm324, %v1294, 0
        %v1299 = vsel %vm324, %v1296, 0
        %1301 = vmatprep.subr.mxu0 0.0
        %1302 = vmatpush1.xpose.msra.mxu0 %v1299
        %1303 = vmatprep.subr.mxu0 0.0
        %1304 = vmatpush1.xpose.msra.mxu0 0.0
        %1305 = vmatprep.subr.mxu0 0.0
        %1306 = vmatpush1.xpose.msra.mxu0 0.0
        %1307 = vmatprep.subr.mxu0 0.0
        %1308 = vmatpush1.xpose.msra.mxu0 0.0
        %1309 = vmatprep.subr.mxu0 0.0
        %1310 = vmatpush1.xpose.msra.mxu0 0.0
        %1311 = vmatprep.subr.mxu0 0.0
        %1312 = vmatpush1.xpose.msra.mxu0 0.0
        %1313 = vmatprep.subr.mxu0 0.0
        %1314 = vmatpush1.xpose.msra.mxu0 0.0
        %1315 = vmatprep.subr.mxu0 0.0
        %1316 = vmatpush1.xpose.msra.mxu0 0.0
        %1317 = vmatprep.subr.mxu0 0.0
        %1318 = vmatpush1.xpose.msra.mxu0 0.0
        %1319 = vmatprep.subr.mxu0 0.0
        %1320 = vmatpush1.xpose.msra.mxu0 0.0
        %1321 = vmatprep.subr.mxu0 0.0
        %1322 = vmatpush1.xpose.msra.mxu0 0.0
        %1323 = vmatprep.subr.mxu0 0.0
        %1324 = vmatpush1.xpose.msra.mxu0 0.0
        %1325 = vmatprep.subr.mxu0 0.0
        %1326 = vmatpush1.xpose.msra.mxu0 0.0
        %1327 = vmatprep.subr.mxu0 0.0
        %1328 = vmatpush1.xpose.msra.mxu0 0.0
        %1329 = vmatprep.subr.mxu0 0.0
        %1330 = vmatpush1.xpose.msra.mxu0 0.0
        %1331 = vmatprep.subr.mxu0 0.0
        %1332 = vmatpush1.xpose.msra.mxu0 0.0
        %1333 = vmatprep.subr.mxu0 0.0
        %1334 = vmatpush1.xpose.msra.mxu0 0.0
        %1335 = vmatprep.subr.mxu0 0.0
        %1336 = vmatpush1.xpose.msra.mxu0 0.0
        %1337 = vmatprep.subr.mxu0 0.0
        %1338 = vmatpush1.xpose.msra.mxu0 0.0
        %1339 = vmatprep.subr.mxu0 0.0
        %1340 = vmatpush1.xpose.msra.mxu0 0.0
        %1341 = vmatprep.subr.mxu0 0.0
        %1342 = vmatpush1.xpose.msra.mxu0 0.0
        %1343 = vmatprep.subr.mxu0 0.0
        %1344 = vmatpush1.xpose.msra.mxu0 0.0
        %1345 = vmatprep.subr.mxu0 0.0
        %1346 = vmatpush1.xpose.msra.mxu0 0.0
        %1347 = vmatprep.subr.mxu0 0.0
        %1348 = vmatpush1.xpose.msra.mxu0 0.0
        %1349 = vmatprep.subr.mxu0 0.0
        %1350 = vmatpush1.xpose.msra.mxu0 0.0
        %1351 = vmatprep.subr.mxu0 0.0
        %1352 = vmatpush1.xpose.msra.mxu0 0.0
        %1353 = vmatprep.subr.mxu0 0.0
        %1354 = vmatpush1.xpose.msra.mxu0 0.0
        %1355 = vmatprep.subr.mxu0 0.0
        %1356 = vmatpush1.xpose.msra.mxu0 0.0
        %1357 = vmatprep.subr.mxu0 0.0
        %1358 = vmatpush1.xpose.msra.mxu0 0.0
        %1359 = vmatprep.subr.mxu0 0.0
        %1360 = vmatpush1.xpose.msra.mxu0 0.0
        %1361 = vmatprep.subr.mxu0 0.0
        %1362 = vmatpush1.xpose.msra.mxu0 0.0
        %1363 = vmatprep.subr.mxu0 0.0
        %1364 = vmatpush1.xpose.msra.mxu0 0.0
        %1365 = vmatprep.mubr.f32.mxu0 0.0
        %1366 = vmatmul.mubr.f32.gmra.mrb[0].mxu0 %v1297
        %v1367 = vpop.f32.mrb[0].mxu0
        %v1368 = vadd.f32 0.0, %v1367
        %v1369 = vpop.f32.mrb[0].mxu0
        %1370 = vdwg.mxu0
        %v1371 = vsel %vm399, %v1368, -inf
        %1372 = vmax.xlane.f32.xlu0 %v1371
        %v1373 = vpop.xlane.xlu0 %1372
        %v1374 = vsub.f32 %v1368, %v1373
        %v1375 = vmul.f32 %v1374, 1.442695
        %v1376 = vpow.pop %v1375
        %v1377 = vsel %vm399, %v1376, 0.0
        %1378 = vadd.xlane.f32.xlu0 %v1377
        %v1379 = vpop.xlane.xlu0 %1378
        %v1380 = vrcp.pop %v1379
        %v1381 = vmul.f32 %v1376, %v1380
        %1382 = vrot.lane.b32.xlu0 %v318, 48
        %v1383 = vpop.permute.xlu0 %1382
        %v1386 = vsel %vm399, %v1381, 0
        %1388 = vmatprep.subr.mxu0 0.0
        %1389 = vmatpush1.msra.mxu0 %v1383
        %1390 = vmatprep.subr.mxu0 0.0
        %1391 = vmatpush1.msra.mxu0 0.0
        %1392 = vmatprep.subr.mxu0 0.0
        %1393 = vmatpush1.msra.mxu0 0.0
        %1394 = vmatprep.subr.mxu0 0.0
        %1395 = vmatpush1.msra.mxu0 0.0
        %1396 = vmatprep.subr.mxu0 0.0
        %1397 = vmatpush1.msra.mxu0 0.0
        %1398 = vmatprep.subr.mxu0 0.0
        %1399 = vmatpush1.msra.mxu0 0.0
        %1400 = vmatprep.subr.mxu0 0.0
        %1401 = vmatpush1.msra.mxu0 0.0
        %1402 = vmatprep.subr.mxu0 0.0
        %1403 = vmatpush1.msra.mxu0 0.0
        %1404 = vmatprep.subr.mxu0 0.0
        %1405 = vmatpush1.msra.mxu0 0.0
        %1406 = vmatprep.subr.mxu0 0.0
        %1407 = vmatpush1.msra.mxu0 0.0
        %1408 = vmatprep.subr.mxu0 0.0
        %1409 = vmatpush1.msra.mxu0 0.0
        %1410 = vmatprep.subr.mxu0 0.0
        %1411 = vmatpush1.msra.mxu0 0.0
        %1412 = vmatprep.subr.mxu0 0.0
        %1413 = vmatpush1.msra.mxu0 0.0
        %1414 = vmatprep.subr.mxu0 0.0
        %1415 = vmatpush1.msra.mxu0 0.0
        %1416 = vmatprep.subr.mxu0 0.0
        %1417 = vmatpush1.msra.mxu0 0.0
        %1418 = vmatprep.subr.mxu0 0.0
        %1419 = vmatpush1.msra.mxu0 0.0
        %1420 = vmatprep.subr.mxu0 0.0
        %1421 = vmatpush1.msra.mxu0 0.0
        %1422 = vmatprep.subr.mxu0 0.0
        %1423 = vmatpush1.msra.mxu0 0.0
        %1424 = vmatprep.subr.mxu0 0.0
        %1425 = vmatpush1.msra.mxu0 0.0
        %1426 = vmatprep.subr.mxu0 0.0
        %1427 = vmatpush1.msra.mxu0 0.0
        %1428 = vmatprep.subr.mxu0 0.0
        %1429 = vmatpush1.msra.mxu0 0.0
        %1430 = vmatprep.subr.mxu0 0.0
        %1431 = vmatpush1.msra.mxu0 0.0
        %1432 = vmatprep.subr.mxu0 0.0
        %1433 = vmatpush1.msra.mxu0 0.0
        %1434 = vmatprep.subr.mxu0 0.0
        %1435 = vmatpush1.msra.mxu0 0.0
        %1436 = vmatprep.subr.mxu0 0.0
        %1437 = vmatpush1.msra.mxu0 0.0
        %1438 = vmatprep.subr.mxu0 0.0
        %1439 = vmatpush1.msra.mxu0 0.0
        %1440 = vmatprep.subr.mxu0 0.0
        %1441 = vmatpush1.msra.mxu0 0.0
        %1442 = vmatprep.subr.mxu0 0.0
        %1443 = vmatpush1.msra.mxu0 0.0
        %1444 = vmatprep.subr.mxu0 0.0
        %1445 = vmatpush1.msra.mxu0 0.0
        %1446 = vmatprep.subr.mxu0 0.0
        %1447 = vmatpush1.msra.mxu0 0.0
        %1448 = vmatprep.subr.mxu0 0.0
        %1449 = vmatpush1.msra.mxu0 0.0
        %1450 = vmatprep.subr.mxu0 0.0
        %1451 = vmatpush1.msra.mxu0 0.0
        %1452 = vmatprep.mubr.f32.mxu0 0.0
        %1453 = vmatmul.mubr.f32.gmra.mrb[0].mxu0 %v1386
        %v1454 = vpop.f32.mrb[0].mxu0
        %v1455 = vadd.f32 0.0, %v1454
        %v1456 = vpop.f32.mrb[0].mxu0
        %1457 = vdwg.mxu0
        %v1458 = vld [vmem:[#allocation7 + $0x10] sm:$0xf]
        %v1460 = vsel %vm324, %v1455, 0
        %v1463 = vsel %vm657, %v1458, 0
        %1465 = vmatprep.subr.mxu0 0.0
        %1466 = vmatpush1.msra.mxu0 %v1463
        %1467 = vmatprep.subr.mxu0 0.0
        %1468 = vmatpush1.msra.mxu0 0.0
        %1469 = vmatprep.subr.mxu0 0.0
        %1470 = vmatpush1.msra.mxu0 0.0
        %1471 = vmatprep.subr.mxu0 0.0
        %1472 = vmatpush1.msra.mxu0 0.0
        %1473 = vmatprep.subr.mxu0 0.0
        %1474 = vmatpush1.msra.mxu0 0.0
        %1475 = vmatprep.subr.mxu0 0.0
        %1476 = vmatpush1.msra.mxu0 0.0
        %1477 = vmatprep.subr.mxu0 0.0
        %1478 = vmatpush1.msra.mxu0 0.0
        %1479 = vmatprep.subr.mxu0 0.0
        %1480 = vmatpush1.msra.mxu0 0.0
        %1481 = vmatprep.subr.mxu0 0.0
        %1482 = vmatpush1.msra.mxu0 0.0
        %1483 = vmatprep.subr.mxu0 0.0
        %1484 = vmatpush1.msra.mxu0 0.0
        %1485 = vmatprep.subr.mxu0 0.0
        %1486 = vmatpush1.msra.mxu0 0.0
        %1487 = vmatprep.subr.mxu0 0.0
        %1488 = vmatpush1.msra.mxu0 0.0
        %1489 = vmatprep.subr.mxu0 0.0
        %1490 = vmatpush1.msra.mxu0 0.0
        %1491 = vmatprep.subr.mxu0 0.0
        %1492 = vmatpush1.msra.mxu0 0.0
        %1493 = vmatprep.subr.mxu0 0.0
        %1494 = vmatpush1.msra.mxu0 0.0
        %1495 = vmatprep.subr.mxu0 0.0
        %1496 = vmatpush1.msra.mxu0 0.0
        %1497 = vmatprep.subr.mxu0 0.0
        %1498 = vmatpush1.msra.mxu0 0.0
        %1499 = vmatprep.subr.mxu0 0.0
        %1500 = vmatpush1.msra.mxu0 0.0
        %1501 = vmatprep.subr.mxu0 0.0
        %1502 = vmatpush1.msra.mxu0 0.0
        %1503 = vmatprep.subr.mxu0 0.0
        %1504 = vmatpush1.msra.mxu0 0.0
        %1505 = vmatprep.subr.mxu0 0.0
        %1506 = vmatpush1.msra.mxu0 0.0
        %1507 = vmatprep.subr.mxu0 0.0
        %1508 = vmatpush1.msra.mxu0 0.0
        %1509 = vmatprep.subr.mxu0 0.0
        %1510 = vmatpush1.msra.mxu0 0.0
        %1511 = vmatprep.subr.mxu0 0.0
        %1512 = vmatpush1.msra.mxu0 0.0
        %1513 = vmatprep.subr.mxu0 0.0
        %1514 = vmatpush1.msra.mxu0 0.0
        %1515 = vmatprep.subr.mxu0 0.0
        %1516 = vmatpush1.msra.mxu0 0.0
        %1517 = vmatprep.subr.mxu0 0.0
        %1518 = vmatpush1.msra.mxu0 0.0
        %1519 = vmatprep.subr.mxu0 0.0
        %1520 = vmatpush1.msra.mxu0 0.0
        %1521 = vmatprep.subr.mxu0 0.0
        %1522 = vmatpush1.msra.mxu0 0.0
        %1523 = vmatprep.subr.mxu0 0.0
        %1524 = vmatpush1.msra.mxu0 0.0
        %1525 = vmatprep.subr.mxu0 0.0
        %1526 = vmatpush1.msra.mxu0 0.0
        %1527 = vmatprep.subr.mxu0 0.0
        %1528 = vmatpush1.msra.mxu0 0.0
        %1529 = vmatprep.mubr.f32.mxu0 0.0
        %1530 = vmatmul.mubr.f32.gmra.mrb[0].mxu0 %v1460
        %v1531 = vpop.f32.mrb[0].mxu0
        %v1532 = vadd.f32 0.0, %v1531
        %v1533 = vpop.f32.mrb[0].mxu0
        %1534 = vdwg.mxu0
        %v1535 = vadd.f32 %v1292, %v1532
        %1536 = vrot.lane.b32.xlu0 %v318, 108
        %v1537 = vpop.permute.xlu0 %1536
        %1538 = vrot.lane.b32.xlu0 %v318, 76
        %v1539 = vpop.permute.xlu0 %1538
        %v1540 = vsel %vm324, %v1537, 0
        %v1542 = vsel %vm324, %v1539, 0
        %1544 = vmatprep.subr.mxu0 0.0
        %1545 = vmatpush1.xpose.msra.mxu0 %v1542
        %1546 = vmatprep.subr.mxu0 0.0
        %1547 = vmatpush1.xpose.msra.mxu0 0.0
        %1548 = vmatprep.subr.mxu0 0.0
        %1549 = vmatpush1.xpose.msra.mxu0 0.0
        %1550 = vmatprep.subr.mxu0 0.0
        %1551 = vmatpush1.xpose.msra.mxu0 0.0
        %1552 = vmatprep.subr.mxu0 0.0
        %1553 = vmatpush1.xpose.msra.mxu0 0.0
        %1554 = vmatprep.subr.mxu0 0.0
        %1555 = vmatpush1.xpose.msra.mxu0 0.0
        %1556 = vmatprep.subr.mxu0 0.0
        %1557 = vmatpush1.xpose.msra.mxu0 0.0
        %1558 = vmatprep.subr.mxu0 0.0
        %1559 = vmatpush1.xpose.msra.mxu0 0.0
        %1560 = vmatprep.subr.mxu0 0.0
        %1561 = vmatpush1.xpose.msra.mxu0 0.0
        %1562 = vmatprep.subr.mxu0 0.0
        %1563 = vmatpush1.xpose.msra.mxu0 0.0
        %1564 = vmatprep.subr.mxu0 0.0
        %1565 = vmatpush1.xpose.msra.mxu0 0.0
        %1566 = vmatprep.subr.mxu0 0.0
        %1567 = vmatpush1.xpose.msra.mxu0 0.0
        %1568 = vmatprep.subr.mxu0 0.0
        %1569 = vmatpush1.xpose.msra.mxu0 0.0
        %1570 = vmatprep.subr.mxu0 0.0
        %1571 = vmatpush1.xpose.msra.mxu0 0.0
        %1572 = vmatprep.subr.mxu0 0.0
        %1573 = vmatpush1.xpose.msra.mxu0 0.0
        %1574 = vmatprep.subr.mxu0 0.0
        %1575 = vmatpush1.xpose.msra.mxu0 0.0
        %1576 = vmatprep.subr.mxu0 0.0
        %1577 = vmatpush1.xpose.msra.mxu0 0.0
        %1578 = vmatprep.subr.mxu0 0.0
        %1579 = vmatpush1.xpose.msra.mxu0 0.0
        %1580 = vmatprep.subr.mxu0 0.0
        %1581 = vmatpush1.xpose.msra.mxu0 0.0
        %1582 = vmatprep.subr.mxu0 0.0
        %1583 = vmatpush1.xpose.msra.mxu0 0.0
        %1584 = vmatprep.subr.mxu0 0.0
        %1585 = vmatpush1.xpose.msra.mxu0 0.0
        %1586 = vmatprep.subr.mxu0 0.0
        %1587 = vmatpush1.xpose.msra.mxu0 0.0
        %1588 = vmatprep.subr.mxu0 0.0
        %1589 = vmatpush1.xpose.msra.mxu0 0.0
        %1590 = vmatprep.subr.mxu0 0.0
        %1591 = vmatpush1.xpose.msra.mxu0 0.0
        %1592 = vmatprep.subr.mxu0 0.0
        %1593 = vmatpush1.xpose.msra.mxu0 0.0
        %1594 = vmatprep.subr.mxu0 0.0
        %1595 = vmatpush1.xpose.msra.mxu0 0.0
        %1596 = vmatprep.subr.mxu0 0.0
        %1597 = vmatpush1.xpose.msra.mxu0 0.0
        %1598 = vmatprep.subr.mxu0 0.0
        %1599 = vmatpush1.xpose.msra.mxu0 0.0
        %1600 = vmatprep.subr.mxu0 0.0
        %1601 = vmatpush1.xpose.msra.mxu0 0.0
        %1602 = vmatprep.subr.mxu0 0.0
        %1603 = vmatpush1.xpose.msra.mxu0 0.0
        %1604 = vmatprep.subr.mxu0 0.0
        %1605 = vmatpush1.xpose.msra.mxu0 0.0
        %1606 = vmatprep.subr.mxu0 0.0
        %1607 = vmatpush1.xpose.msra.mxu0 0.0
        %1608 = vmatprep.mubr.f32.mxu0 0.0
        %1609 = vmatmul.mubr.f32.gmra.mrb[0].mxu0 %v1540
        %v1610 = vpop.f32.mrb[0].mxu0
        %v1611 = vadd.f32 0.0, %v1610
        %v1612 = vpop.f32.mrb[0].mxu0
        %1613 = vdwg.mxu0
        %v1614 = vsel %vm399, %v1611, -inf
        %1615 = vmax.xlane.f32.xlu0 %v1614
        %v1616 = vpop.xlane.xlu0 %1615
        %v1617 = vsub.f32 %v1611, %v1616
        %v1618 = vmul.f32 %v1617, 1.442695
        %v1619 = vpow.pop %v1618
        %v1620 = vsel %vm399, %v1619, 0.0
        %1621 = vadd.xlane.f32.xlu0 %v1620
        %v1622 = vpop.xlane.xlu0 %1621
        %v1623 = vrcp.pop %v1622
        %v1624 = vmul.f32 %v1619, %v1623
        %1625 = vrot.lane.b32.xlu0 %v318, 44
        %v1626 = vpop.permute.xlu0 %1625
        %v1629 = vsel %vm399, %v1624, 0
        %1631 = vmatprep.subr.mxu0 0.0
        %1632 = vmatpush1.msra.mxu0 %v1626
        %1633 = vmatprep.subr.mxu0 0.0
        %1634 = vmatpush1.msra.mxu0 0.0
        %1635 = vmatprep.subr.mxu0 0.0
        %1636 = vmatpush1.msra.mxu0 0.0
        %1637 = vmatprep.subr.mxu0 0.0
        %1638 = vmatpush1.msra.mxu0 0.0
        %1639 = vmatprep.subr.mxu0 0.0
        %1640 = vmatpush1.msra.mxu0 0.0
        %1641 = vmatprep.subr.mxu0 0.0
        %1642 = vmatpush1.msra.mxu0 0.0
        %1643 = vmatprep.subr.mxu0 0.0
        %1644 = vmatpush1.msra.mxu0 0.0
        %1645 = vmatprep.subr.mxu0 0.0
        %1646 = vmatpush1.msra.mxu0 0.0
        %1647 = vmatprep.subr.mxu0 0.0
        %1648 = vmatpush1.msra.mxu0 0.0
        %1649 = vmatprep.subr.mxu0 0.0
        %1650 = vmatpush1.msra.mxu0 0.0
        %1651 = vmatprep.subr.mxu0 0.0
        %1652 = vmatpush1.msra.mxu0 0.0
        %1653 = vmatprep.subr.mxu0 0.0
        %1654 = vmatpush1.msra.mxu0 0.0
        %1655 = vmatprep.subr.mxu0 0.0
        %1656 = vmatpush1.msra.mxu0 0.0
        %1657 = vmatprep.subr.mxu0 0.0
        %1658 = vmatpush1.msra.mxu0 0.0
        %1659 = vmatprep.subr.mxu0 0.0
        %1660 = vmatpush1.msra.mxu0 0.0
        %1661 = vmatprep.subr.mxu0 0.0
        %1662 = vmatpush1.msra.mxu0 0.0
        %1663 = vmatprep.subr.mxu0 0.0
        %1664 = vmatpush1.msra.mxu0 0.0
        %1665 = vmatprep.subr.mxu0 0.0
        %1666 = vmatpush1.msra.mxu0 0.0
        %1667 = vmatprep.subr.mxu0 0.0
        %1668 = vmatpush1.msra.mxu0 0.0
        %1669 = vmatprep.subr.mxu0 0.0
        %1670 = vmatpush1.msra.mxu0 0.0
        %1671 = vmatprep.subr.mxu0 0.0
        %1672 = vmatpush1.msra.mxu0 0.0
        %1673 = vmatprep.subr.mxu0 0.0
        %1674 = vmatpush1.msra.mxu0 0.0
        %1675 = vmatprep.subr.mxu0 0.0
        %1676 = vmatpush1.msra.mxu0 0.0
        %1677 = vmatprep.subr.mxu0 0.0
        %1678 = vmatpush1.msra.mxu0 0.0
        %1679 = vmatprep.subr.mxu0 0.0
        %1680 = vmatpush1.msra.mxu0 0.0
        %1681 = vmatprep.subr.mxu0 0.0
        %1682 = vmatpush1.msra.mxu0 0.0
        %1683 = vmatprep.subr.mxu0 0.0
        %1684 = vmatpush1.msra.mxu0 0.0
        %1685 = vmatprep.subr.mxu0 0.0
        %1686 = vmatpush1.msra.mxu0 0.0
        %1687 = vmatprep.subr.mxu0 0.0
        %1688 = vmatpush1.msra.mxu0 0.0
        %1689 = vmatprep.subr.mxu0 0.0
        %1690 = vmatpush1.msra.mxu0 0.0
        %1691 = vmatprep.subr.mxu0 0.0
        %1692 = vmatpush1.msra.mxu0 0.0
        %1693 = vmatprep.subr.mxu0 0.0
        %1694 = vmatpush1.msra.mxu0 0.0
        %1695 = vmatprep.mubr.f32.mxu0 0.0
        %1696 = vmatmul.mubr.f32.gmra.mrb[0].mxu0 %v1629
        %v1697 = vpop.f32.mrb[0].mxu0
        %v1698 = vadd.f32 0.0, %v1697
        %v1699 = vpop.f32.mrb[0].mxu0
        %1700 = vdwg.mxu0
        %v1701 = vld [vmem:[#allocation7 + $0x14] sm:$0xf]
        %v1703 = vsel %vm324, %v1698, 0
        %v1706 = vsel %vm657, %v1701, 0
        %1708 = vmatprep.subr.mxu0 0.0
        %1709 = vmatpush1.msra.mxu0 %v1706
        %1710 = vmatprep.subr.mxu0 0.0
        %1711 = vmatpush1.msra.mxu0 0.0
        %1712 = vmatprep.subr.mxu0 0.0
        %1713 = vmatpush1.msra.mxu0 0.0
        %1714 = vmatprep.subr.mxu0 0.0
        %1715 = vmatpush1.msra.mxu0 0.0
        %1716 = vmatprep.subr.mxu0 0.0
        %1717 = vmatpush1.msra.mxu0 0.0
        %1718 = vmatprep.subr.mxu0 0.0
        %1719 = vmatpush1.msra.mxu0 0.0
        %1720 = vmatprep.subr.mxu0 0.0
        %1721 = vmatpush1.msra.mxu0 0.0
        %1722 = vmatprep.subr.mxu0 0.0
        %1723 = vmatpush1.msra.mxu0 0.0
        %1724 = vmatprep.subr.mxu0 0.0
        %1725 = vmatpush1.msra.mxu0 0.0
        %1726 = vmatprep.subr.mxu0 0.0
        %1727 = vmatpush1.msra.mxu0 0.0
        %1728 = vmatprep.subr.mxu0 0.0
        %1729 = vmatpush1.msra.mxu0 0.0
        %1730 = vmatprep.subr.mxu0 0.0
        %1731 = vmatpush1.msra.mxu0 0.0
        %1732 = vmatprep.subr.mxu0 0.0
        %1733 = vmatpush1.msra.mxu0 0.0
        %1734 = vmatprep.subr.mxu0 0.0
        %1735 = vmatpush1.msra.mxu0 0.0
        %1736 = vmatprep.subr.mxu0 0.0
        %1737 = vmatpush1.msra.mxu0 0.0
        %1738 = vmatprep.subr.mxu0 0.0
        %1739 = vmatpush1.msra.mxu0 0.0
        %1740 = vmatprep.subr.mxu0 0.0
        %1741 = vmatpush1.msra.mxu0 0.0
        %1742 = vmatprep.subr.mxu0 0.0
        %1743 = vmatpush1.msra.mxu0 0.0
        %1744 = vmatprep.subr.mxu0 0.0
        %1745 = vmatpush1.msra.mxu0 0.0
        %1746 = vmatprep.subr.mxu0 0.0
        %1747 = vmatpush1.msra.mxu0 0.0
        %1748 = vmatprep.subr.mxu0 0.0
        %1749 = vmatpush1.msra.mxu0 0.0
        %1750 = vmatprep.subr.mxu0 0.0
        %1751 = vmatpush1.msra.mxu0 0.0
        %1752 = vmatprep.subr.mxu0 0.0
        %1753 = vmatpush1.msra.mxu0 0.0
        %1754 = vmatprep.subr.mxu0 0.0
        %1755 = vmatpush1.msra.mxu0 0.0
        %1756 = vmatprep.subr.mxu0 0.0
        %1757 = vmatpush1.msra.mxu0 0.0
        %1758 = vmatprep.subr.mxu0 0.0
        %1759 = vmatpush1.msra.mxu0 0.0
        %1760 = vmatprep.subr.mxu0 0.0
        %1761 = vmatpush1.msra.mxu0 0.0
        %1762 = vmatprep.subr.mxu0 0.0
        %1763 = vmatpush1.msra.mxu0 0.0
        %1764 = vmatprep.subr.mxu0 0.0
        %1765 = vmatpush1.msra.mxu0 0.0
        %1766 = vmatprep.subr.mxu0 0.0
        %1767 = vmatpush1.msra.mxu0 0.0
        %1768 = vmatprep.subr.mxu0 0.0
        %1769 = vmatpush1.msra.mxu0 0.0
        %1770 = vmatprep.subr.mxu0 0.0
        %1771 = vmatpush1.msra.mxu0 0.0
        %1772 = vmatprep.mubr.f32.mxu0 0.0
        %1773 = vmatmul.mubr.f32.gmra.mrb[0].mxu0 %v1703
        %v1774 = vpop.f32.mrb[0].mxu0
        %v1775 = vadd.f32 0.0, %v1774
        %v1776 = vpop.f32.mrb[0].mxu0
        %1777 = vdwg.mxu0
        %v1778 = vadd.f32 %v1535, %v1775
        %1779 = vrot.lane.b32.xlu0 %v318, 104
        %v1780 = vpop.permute.xlu0 %1779
        %1781 = vrot.lane.b32.xlu0 %v318, 72
        %v1782 = vpop.permute.xlu0 %1781
        %v1783 = vsel %vm324, %v1780, 0
        %v1785 = vsel %vm324, %v1782, 0
        %1787 = vmatprep.subr.mxu0 0.0
        %1788 = vmatpush1.xpose.msra.mxu0 %v1785
        %1789 = vmatprep.subr.mxu0 0.0
        %1790 = vmatpush1.xpose.msra.mxu0 0.0
        %1791 = vmatprep.subr.mxu0 0.0
        %1792 = vmatpush1.xpose.msra.mxu0 0.0
        %1793 = vmatprep.subr.mxu0 0.0
        %1794 = vmatpush1.xpose.msra.mxu0 0.0
        %1795 = vmatprep.subr.mxu0 0.0
        %1796 = vmatpush1.xpose.msra.mxu0 0.0
        %1797 = vmatprep.subr.mxu0 0.0
        %1798 = vmatpush1.xpose.msra.mxu0 0.0
        %1799 = vmatprep.subr.mxu0 0.0
        %1800 = vmatpush1.xpose.msra.mxu0 0.0
        %1801 = vmatprep.subr.mxu0 0.0
        %1802 = vmatpush1.xpose.msra.mxu0 0.0
        %1803 = vmatprep.subr.mxu0 0.0
        %1804 = vmatpush1.xpose.msra.mxu0 0.0
        %1805 = vmatprep.subr.mxu0 0.0
        %1806 = vmatpush1.xpose.msra.mxu0 0.0
        %1807 = vmatprep.subr.mxu0 0.0
        %1808 = vmatpush1.xpose.msra.mxu0 0.0
        %1809 = vmatprep.subr.mxu0 0.0
        %1810 = vmatpush1.xpose.msra.mxu0 0.0
        %1811 = vmatprep.subr.mxu0 0.0
        %1812 = vmatpush1.xpose.msra.mxu0 0.0
        %1813 = vmatprep.subr.mxu0 0.0
        %1814 = vmatpush1.xpose.msra.mxu0 0.0
        %1815 = vmatprep.subr.mxu0 0.0
        %1816 = vmatpush1.xpose.msra.mxu0 0.0
        %1817 = vmatprep.subr.mxu0 0.0
        %1818 = vmatpush1.xpose.msra.mxu0 0.0
        %1819 = vmatprep.subr.mxu0 0.0
        %1820 = vmatpush1.xpose.msra.mxu0 0.0
        %1821 = vmatprep.subr.mxu0 0.0
        %1822 = vmatpush1.xpose.msra.mxu0 0.0
        %1823 = vmatprep.subr.mxu0 0.0
        %1824 = vmatpush1.xpose.msra.mxu0 0.0
        %1825 = vmatprep.subr.mxu0 0.0
        %1826 = vmatpush1.xpose.msra.mxu0 0.0
        %1827 = vmatprep.subr.mxu0 0.0
        %1828 = vmatpush1.xpose.msra.mxu0 0.0
        %1829 = vmatprep.subr.mxu0 0.0
        %1830 = vmatpush1.xpose.msra.mxu0 0.0
        %1831 = vmatprep.subr.mxu0 0.0
        %1832 = vmatpush1.xpose.msra.mxu0 0.0
        %1833 = vmatprep.subr.mxu0 0.0
        %1834 = vmatpush1.xpose.msra.mxu0 0.0
        %1835 = vmatprep.subr.mxu0 0.0
        %1836 = vmatpush1.xpose.msra.mxu0 0.0
        %1837 = vmatprep.subr.mxu0 0.0
        %1838 = vmatpush1.xpose.msra.mxu0 0.0
        %1839 = vmatprep.subr.mxu0 0.0
        %1840 = vmatpush1.xpose.msra.mxu0 0.0
        %1841 = vmatprep.subr.mxu0 0.0
        %1842 = vmatpush1.xpose.msra.mxu0 0.0
        %1843 = vmatprep.subr.mxu0 0.0
        %1844 = vmatpush1.xpose.msra.mxu0 0.0
        %1845 = vmatprep.subr.mxu0 0.0
        %1846 = vmatpush1.xpose.msra.mxu0 0.0
        %1847 = vmatprep.subr.mxu0 0.0
        %1848 = vmatpush1.xpose.msra.mxu0 0.0
        %1849 = vmatprep.subr.mxu0 0.0
        %1850 = vmatpush1.xpose.msra.mxu0 0.0
        %1851 = vmatprep.mubr.f32.mxu0 0.0
        %1852 = vmatmul.mubr.f32.gmra.mrb[0].mxu0 %v1783
        %v1853 = vpop.f32.mrb[0].mxu0
        %v1854 = vadd.f32 0.0, %v1853
        %v1855 = vpop.f32.mrb[0].mxu0
        %1856 = vdwg.mxu0
        %v1857 = vsel %vm399, %v1854, -inf
        %1858 = vmax.xlane.f32.xlu0 %v1857
        %v1859 = vpop.xlane.xlu0 %1858
        %v1860 = vsub.f32 %v1854, %v1859
        %v1861 = vmul.f32 %v1860, 1.442695
        %v1862 = vpow.pop %v1861
        %v1863 = vsel %vm399, %v1862, 0.0
        %1864 = vadd.xlane.f32.xlu0 %v1863
        %v1865 = vpop.xlane.xlu0 %1864
        %v1866 = vrcp.pop %v1865
        %v1867 = vmul.f32 %v1862, %v1866
        %1868 = vrot.lane.b32.xlu0 %v318, 40
        %v1869 = vpop.permute.xlu0 %1868
        %v1872 = vsel %vm399, %v1867, 0
        %1874 = vmatprep.subr.mxu0 0.0
        %1875 = vmatpush1.msra.mxu0 %v1869
        %1876 = vmatprep.subr.mxu0 0.0
        %1877 = vmatpush1.msra.mxu0 0.0
        %1878 = vmatprep.subr.mxu0 0.0
        %1879 = vmatpush1.msra.mxu0 0.0
        %1880 = vmatprep.subr.mxu0 0.0
        %1881 = vmatpush1.msra.mxu0 0.0
        %1882 = vmatprep.subr.mxu0 0.0
        %1883 = vmatpush1.msra.mxu0 0.0
        %1884 = vmatprep.subr.mxu0 0.0
        %1885 = vmatpush1.msra.mxu0 0.0
        %1886 = vmatprep.subr.mxu0 0.0
        %1887 = vmatpush1.msra.mxu0 0.0
        %1888 = vmatprep.subr.mxu0 0.0
        %1889 = vmatpush1.msra.mxu0 0.0
        %1890 = vmatprep.subr.mxu0 0.0
        %1891 = vmatpush1.msra.mxu0 0.0
        %1892 = vmatprep.subr.mxu0 0.0
        %1893 = vmatpush1.msra.mxu0 0.0
        %1894 = vmatprep.subr.mxu0 0.0
        %1895 = vmatpush1.msra.mxu0 0.0
        %1896 = vmatprep.subr.mxu0 0.0
        %1897 = vmatpush1.msra.mxu0 0.0
        %1898 = vmatprep.subr.mxu0 0.0
        %1899 = vmatpush1.msra.mxu0 0.0
        %1900 = vmatprep.subr.mxu0 0.0
        %1901 = vmatpush1.msra.mxu0 0.0
        %1902 = vmatprep.subr.mxu0 0.0
        %1903 = vmatpush1.msra.mxu0 0.0
        %1904 = vmatprep.subr.mxu0 0.0
        %1905 = vmatpush1.msra.mxu0 0.0
        %1906 = vmatprep.subr.mxu0 0.0
        %1907 = vmatpush1.msra.mxu0 0.0
        %1908 = vmatprep.subr.mxu0 0.0
        %1909 = vmatpush1.msra.mxu0 0.0
        %1910 = vmatprep.subr.mxu0 0.0
        %1911 = vmatpush1.msra.mxu0 0.0
        %1912 = vmatprep.subr.mxu0 0.0
        %1913 = vmatpush1.msra.mxu0 0.0
        %1914 = vmatprep.subr.mxu0 0.0
        %1915 = vmatpush1.msra.mxu0 0.0
        %1916 = vmatprep.subr.mxu0 0.0
        %1917 = vmatpush1.msra.mxu0 0.0
        %1918 = vmatprep.subr.mxu0 0.0
        %1919 = vmatpush1.msra.mxu0 0.0
        %1920 = vmatprep.subr.mxu0 0.0
        %1921 = vmatpush1.msra.mxu0 0.0
        %1922 = vmatprep.subr.mxu0 0.0
        %1923 = vmatpush1.msra.mxu0 0.0
        %1924 = vmatprep.subr.mxu0 0.0
        %1925 = vmatpush1.msra.mxu0 0.0
        %1926 = vmatprep.subr.mxu0 0.0
        %1927 = vmatpush1.msra.mxu0 0.0
        %1928 = vmatprep.subr.mxu0 0.0
        %1929 = vmatpush1.msra.mxu0 0.0
        %1930 = vmatprep.subr.mxu0 0.0
        %1931 = vmatpush1.msra.mxu0 0.0
        %1932 = vmatprep.subr.mxu0 0.0
        %1933 = vmatpush1.msra.mxu0 0.0
        %1934 = vmatprep.subr.mxu0 0.0
        %1935 = vmatpush1.msra.mxu0 0.0
        %1936 = vmatprep.subr.mxu0 0.0
        %1937 = vmatpush1.msra.mxu0 0.0
        %1938 = vmatprep.mubr.f32.mxu0 0.0
        %1939 = vmatmul.mubr.f32.gmra.mrb[0].mxu0 %v1872
        %v1940 = vpop.f32.mrb[0].mxu0
        %v1941 = vadd.f32 0.0, %v1940
        %v1942 = vpop.f32.mrb[0].mxu0
        %1943 = vdwg.mxu0
        %v1944 = vld [vmem:[#allocation7 + $0x18] sm:$0xf]
        %v1946 = vsel %vm324, %v1941, 0
        %v1949 = vsel %vm657, %v1944, 0
        %1951 = vmatprep.subr.mxu0 0.0
        %1952 = vmatpush1.msra.mxu0 %v1949
        %1953 = vmatprep.subr.mxu0 0.0
        %1954 = vmatpush1.msra.mxu0 0.0
        %1955 = vmatprep.subr.mxu0 0.0
        %1956 = vmatpush1.msra.mxu0 0.0
        %1957 = vmatprep.subr.mxu0 0.0
        %1958 = vmatpush1.msra.mxu0 0.0
        %1959 = vmatprep.subr.mxu0 0.0
        %1960 = vmatpush1.msra.mxu0 0.0
        %1961 = vmatprep.subr.mxu0 0.0
        %1962 = vmatpush1.msra.mxu0 0.0
        %1963 = vmatprep.subr.mxu0 0.0
        %1964 = vmatpush1.msra.mxu0 0.0
        %1965 = vmatprep.subr.mxu0 0.0
        %1966 = vmatpush1.msra.mxu0 0.0
        %1967 = vmatprep.subr.mxu0 0.0
        %1968 = vmatpush1.msra.mxu0 0.0
        %1969 = vmatprep.subr.mxu0 0.0
        %1970 = vmatpush1.msra.mxu0 0.0
        %1971 = vmatprep.subr.mxu0 0.0
        %1972 = vmatpush1.msra.mxu0 0.0
        %1973 = vmatprep.subr.mxu0 0.0
        %1974 = vmatpush1.msra.mxu0 0.0
        %1975 = vmatprep.subr.mxu0 0.0
        %1976 = vmatpush1.msra.mxu0 0.0
        %1977 = vmatprep.subr.mxu0 0.0
        %1978 = vmatpush1.msra.mxu0 0.0
        %1979 = vmatprep.subr.mxu0 0.0
        %1980 = vmatpush1.msra.mxu0 0.0
        %1981 = vmatprep.subr.mxu0 0.0
        %1982 = vmatpush1.msra.mxu0 0.0
        %1983 = vmatprep.subr.mxu0 0.0
        %1984 = vmatpush1.msra.mxu0 0.0
        %1985 = vmatprep.subr.mxu0 0.0
        %1986 = vmatpush1.msra.mxu0 0.0
        %1987 = vmatprep.subr.mxu0 0.0
        %1988 = vmatpush1.msra.mxu0 0.0
        %1989 = vmatprep.subr.mxu0 0.0
        %1990 = vmatpush1.msra.mxu0 0.0
        %1991 = vmatprep.subr.mxu0 0.0
        %1992 = vmatpush1.msra.mxu0 0.0
        %1993 = vmatprep.subr.mxu0 0.0
        %1994 = vmatpush1.msra.mxu0 0.0
        %1995 = vmatprep.subr.mxu0 0.0
        %1996 = vmatpush1.msra.mxu0 0.0
        %1997 = vmatprep.subr.mxu0 0.0
        %1998 = vmatpush1.msra.mxu0 0.0
        %1999 = vmatprep.subr.mxu0 0.0
        %2000 = vmatpush1.msra.mxu0 0.0
        %2001 = vmatprep.subr.mxu0 0.0
        %2002 = vmatpush1.msra.mxu0 0.0
        %2003 = vmatprep.subr.mxu0 0.0
        %2004 = vmatpush1.msra.mxu0 0.0
        %2005 = vmatprep.subr.mxu0 0.0
        %2006 = vmatpush1.msra.mxu0 0.0
        %2007 = vmatprep.subr.mxu0 0.0
        %2008 = vmatpush1.msra.mxu0 0.0
        %2009 = vmatprep.subr.mxu0 0.0
        %2010 = vmatpush1.msra.mxu0 0.0
        %2011 = vmatprep.subr.mxu0 0.0
        %2012 = vmatpush1.msra.mxu0 0.0
        %2013 = vmatprep.subr.mxu0 0.0
        %2014 = vmatpush1.msra.mxu0 0.0
        %2015 = vmatprep.mubr.f32.mxu0 0.0
        %2016 = vmatmul.mubr.f32.gmra.mrb[0].mxu0 %v1946
        %v2017 = vpop.f32.mrb[0].mxu0
        %v2018 = vadd.f32 0.0, %v2017
        %v2019 = vpop.f32.mrb[0].mxu0
        %2020 = vdwg.mxu0
        %v2021 = vadd.f32 %v1778, %v2018
        %2022 = vrot.lane.b32.xlu0 %v318, 100
        %v2023 = vpop.permute.xlu0 %2022
        %2024 = vrot.lane.b32.xlu0 %v318, 68
        %v2025 = vpop.permute.xlu0 %2024
        %v2026 = vsel %vm324, %v2023, 0
        %v2028 = vsel %vm324, %v2025, 0
        %2030 = vmatprep.subr.mxu0 0.0
        %2031 = vmatpush1.xpose.msra.mxu0 %v2028
        %2032 = vmatprep.subr.mxu0 0.0
        %2033 = vmatpush1.xpose.msra.mxu0 0.0
        %2034 = vmatprep.subr.mxu0 0.0
        %2035 = vmatpush1.xpose.msra.mxu0 0.0
        %2036 = vmatprep.subr.mxu0 0.0
        %2037 = vmatpush1.xpose.msra.mxu0 0.0
        %2038 = vmatprep.subr.mxu0 0.0
        %2039 = vmatpush1.xpose.msra.mxu0 0.0
        %2040 = vmatprep.subr.mxu0 0.0
        %2041 = vmatpush1.xpose.msra.mxu0 0.0
        %2042 = vmatprep.subr.mxu0 0.0
        %2043 = vmatpush1.xpose.msra.mxu0 0.0
        %2044 = vmatprep.subr.mxu0 0.0
        %2045 = vmatpush1.xpose.msra.mxu0 0.0
        %2046 = vmatprep.subr.mxu0 0.0
        %2047 = vmatpush1.xpose.msra.mxu0 0.0
        %2048 = vmatprep.subr.mxu0 0.0
        %2049 = vmatpush1.xpose.msra.mxu0 0.0
        %2050 = vmatprep.subr.mxu0 0.0
        %2051 = vmatpush1.xpose.msra.mxu0 0.0
        %2052 = vmatprep.subr.mxu0 0.0
        %2053 = vmatpush1.xpose.msra.mxu0 0.0
        %2054 = vmatprep.subr.mxu0 0.0
        %2055 = vmatpush1.xpose.msra.mxu0 0.0
        %2056 = vmatprep.subr.mxu0 0.0
        %2057 = vmatpush1.xpose.msra.mxu0 0.0
        %2058 = vmatprep.subr.mxu0 0.0
        %2059 = vmatpush1.xpose.msra.mxu0 0.0
        %2060 = vmatprep.subr.mxu0 0.0
        %2061 = vmatpush1.xpose.msra.mxu0 0.0
        %2062 = vmatprep.subr.mxu0 0.0
        %2063 = vmatpush1.xpose.msra.mxu0 0.0
        %2064 = vmatprep.subr.mxu0 0.0
        %2065 = vmatpush1.xpose.msra.mxu0 0.0
        %2066 = vmatprep.subr.mxu0 0.0
        %2067 = vmatpush1.xpose.msra.mxu0 0.0
        %2068 = vmatprep.subr.mxu0 0.0
        %2069 = vmatpush1.xpose.msra.mxu0 0.0
        %2070 = vmatprep.subr.mxu0 0.0
        %2071 = vmatpush1.xpose.msra.mxu0 0.0
        %2072 = vmatprep.subr.mxu0 0.0
        %2073 = vmatpush1.xpose.msra.mxu0 0.0
        %2074 = vmatprep.subr.mxu0 0.0
        %2075 = vmatpush1.xpose.msra.mxu0 0.0
        %2076 = vmatprep.subr.mxu0 0.0
        %2077 = vmatpush1.xpose.msra.mxu0 0.0
        %2078 = vmatprep.subr.mxu0 0.0
        %2079 = vmatpush1.xpose.msra.mxu0 0.0
        %2080 = vmatprep.subr.mxu0 0.0
        %2081 = vmatpush1.xpose.msra.mxu0 0.0
        %2082 = vmatprep.subr.mxu0 0.0
        %2083 = vmatpush1.xpose.msra.mxu0 0.0
        %2084 = vmatprep.subr.mxu0 0.0
        %2085 = vmatpush1.xpose.msra.mxu0 0.0
        %2086 = vmatprep.subr.mxu0 0.0
        %2087 = vmatpush1.xpose.msra.mxu0 0.0
        %2088 = vmatprep.subr.mxu0 0.0
        %2089 = vmatpush1.xpose.msra.mxu0 0.0
        %2090 = vmatprep.subr.mxu0 0.0
        %2091 = vmatpush1.xpose.msra.mxu0 0.0
        %2092 = vmatprep.subr.mxu0 0.0
        %2093 = vmatpush1.xpose.msra.mxu0 0.0
        %2094 = vmatprep.mubr.f32.mxu0 0.0
        %2095 = vmatmul.mubr.f32.gmra.mrb[0].mxu0 %v2026
        %v2096 = vpop.f32.mrb[0].mxu0
        %v2097 = vadd.f32 0.0, %v2096
        %v2098 = vpop.f32.mrb[0].mxu0
        %2099 = vdwg.mxu0
        %v2100 = vsel %vm399, %v2097, -inf
        %2101 = vmax.xlane.f32.xlu0 %v2100
        %v2102 = vpop.xlane.xlu0 %2101
        %v2103 = vsub.f32 %v2097, %v2102
        %v2104 = vmul.f32 %v2103, 1.442695
        %v2105 = vpow.pop %v2104
        %v2106 = vsel %vm399, %v2105, 0.0
        %2107 = vadd.xlane.f32.xlu0 %v2106
        %v2108 = vpop.xlane.xlu0 %2107
        %v2109 = vrcp.pop %v2108
        %v2110 = vmul.f32 %v2105, %v2109
        %2111 = vrot.lane.b32.xlu0 %v318, 36
        %v2112 = vpop.permute.xlu0 %2111
        %v2115 = vsel %vm399, %v2110, 0
        %2117 = vmatprep.subr.mxu0 0.0
        %2118 = vmatpush1.msra.mxu0 %v2112
        %2119 = vmatprep.subr.mxu0 0.0
        %2120 = vmatpush1.msra.mxu0 0.0
        %2121 = vmatprep.subr.mxu0 0.0
        %2122 = vmatpush1.msra.mxu0 0.0
        %2123 = vmatprep.subr.mxu0 0.0
        %2124 = vmatpush1.msra.mxu0 0.0
        %2125 = vmatprep.subr.mxu0 0.0
        %2126 = vmatpush1.msra.mxu0 0.0
        %2127 = vmatprep.subr.mxu0 0.0
        %2128 = vmatpush1.msra.mxu0 0.0
        %2129 = vmatprep.subr.mxu0 0.0
        %2130 = vmatpush1.msra.mxu0 0.0
        %2131 = vmatprep.subr.mxu0 0.0
        %2132 = vmatpush1.msra.mxu0 0.0
        %2133 = vmatprep.subr.mxu0 0.0
        %2134 = vmatpush1.msra.mxu0 0.0
        %2135 = vmatprep.subr.mxu0 0.0
        %2136 = vmatpush1.msra.mxu0 0.0
        %2137 = vmatprep.subr.mxu0 0.0
        %2138 = vmatpush1.msra.mxu0 0.0
        %2139 = vmatprep.subr.mxu0 0.0
        %2140 = vmatpush1.msra.mxu0 0.0
        %2141 = vmatprep.subr.mxu0 0.0
        %2142 = vmatpush1.msra.mxu0 0.0
        %2143 = vmatprep.subr.mxu0 0.0
        %2144 = vmatpush1.msra.mxu0 0.0
        %2145 = vmatprep.subr.mxu0 0.0
        %2146 = vmatpush1.msra.mxu0 0.0
        %2147 = vmatprep.subr.mxu0 0.0
        %2148 = vmatpush1.msra.mxu0 0.0
        %2149 = vmatprep.subr.mxu0 0.0
        %2150 = vmatpush1.msra.mxu0 0.0
        %2151 = vmatprep.subr.mxu0 0.0
        %2152 = vmatpush1.msra.mxu0 0.0
        %2153 = vmatprep.subr.mxu0 0.0
        %2154 = vmatpush1.msra.mxu0 0.0
        %2155 = vmatprep.subr.mxu0 0.0
        %2156 = vmatpush1.msra.mxu0 0.0
        %2157 = vmatprep.subr.mxu0 0.0
        %2158 = vmatpush1.msra.mxu0 0.0
        %2159 = vmatprep.subr.mxu0 0.0
        %2160 = vmatpush1.msra.mxu0 0.0
        %2161 = vmatprep.subr.mxu0 0.0
        %2162 = vmatpush1.msra.mxu0 0.0
        %2163 = vmatprep.subr.mxu0 0.0
        %2164 = vmatpush1.msra.mxu0 0.0
        %2165 = vmatprep.subr.mxu0 0.0
        %2166 = vmatpush1.msra.mxu0 0.0
        %2167 = vmatprep.subr.mxu0 0.0
        %2168 = vmatpush1.msra.mxu0 0.0
        %2169 = vmatprep.subr.mxu0 0.0
        %2170 = vmatpush1.msra.mxu0 0.0
        %2171 = vmatprep.subr.mxu0 0.0
        %2172 = vmatpush1.msra.mxu0 0.0
        %2173 = vmatprep.subr.mxu0 0.0
        %2174 = vmatpush1.msra.mxu0 0.0
        %2175 = vmatprep.subr.mxu0 0.0
        %2176 = vmatpush1.msra.mxu0 0.0
        %2177 = vmatprep.subr.mxu0 0.0
        %2178 = vmatpush1.msra.mxu0 0.0
        %2179 = vmatprep.subr.mxu0 0.0
        %2180 = vmatpush1.msra.mxu0 0.0
        %2181 = vmatprep.mubr.f32.mxu0 0.0
        %2182 = vmatmul.mubr.f32.gmra.mrb[0].mxu0 %v2115
        %v2183 = vpop.f32.mrb[0].mxu0
        %v2184 = vadd.f32 0.0, %v2183
        %v2185 = vpop.f32.mrb[0].mxu0
        %2186 = vdwg.mxu0
        %v2187 = vld [vmem:[#allocation7 + $0x1c] sm:$0xf]
        %v2189 = vsel %vm324, %v2184, 0
        %v2192 = vsel %vm657, %v2187, 0
        %2194 = vmatprep.subr.mxu0 0.0
        %2195 = vmatpush1.msra.mxu0 %v2192
        %2196 = vmatprep.subr.mxu0 0.0
        %2197 = vmatpush1.msra.mxu0 0.0
        %2198 = vmatprep.subr.mxu0 0.0
        %2199 = vmatpush1.msra.mxu0 0.0
        %2200 = vmatprep.subr.mxu0 0.0
        %2201 = vmatpush1.msra.mxu0 0.0
        %2202 = vmatprep.subr.mxu0 0.0
        %2203 = vmatpush1.msra.mxu0 0.0
        %2204 = vmatprep.subr.mxu0 0.0
        %2205 = vmatpush1.msra.mxu0 0.0
        %2206 = vmatprep.subr.mxu0 0.0
        %2207 = vmatpush1.msra.mxu0 0.0
        %2208 = vmatprep.subr.mxu0 0.0
        %2209 = vmatpush1.msra.mxu0 0.0
        %2210 = vmatprep.subr.mxu0 0.0
        %2211 = vmatpush1.msra.mxu0 0.0
        %2212 = vmatprep.subr.mxu0 0.0
        %2213 = vmatpush1.msra.mxu0 0.0
        %2214 = vmatprep.subr.mxu0 0.0
        %2215 = vmatpush1.msra.mxu0 0.0
        %2216 = vmatprep.subr.mxu0 0.0
        %2217 = vmatpush1.msra.mxu0 0.0
        %2218 = vmatprep.subr.mxu0 0.0
        %2219 = vmatpush1.msra.mxu0 0.0
        %2220 = vmatprep.subr.mxu0 0.0
        %2221 = vmatpush1.msra.mxu0 0.0
        %2222 = vmatprep.subr.mxu0 0.0
        %2223 = vmatpush1.msra.mxu0 0.0
        %2224 = vmatprep.subr.mxu0 0.0
        %2225 = vmatpush1.msra.mxu0 0.0
        %2226 = vmatprep.subr.mxu0 0.0
        %2227 = vmatpush1.msra.mxu0 0.0
        %2228 = vmatprep.subr.mxu0 0.0
        %2229 = vmatpush1.msra.mxu0 0.0
        %2230 = vmatprep.subr.mxu0 0.0
        %2231 = vmatpush1.msra.mxu0 0.0
        %2232 = vmatprep.subr.mxu0 0.0
        %2233 = vmatpush1.msra.mxu0 0.0
        %2234 = vmatprep.subr.mxu0 0.0
        %2235 = vmatpush1.msra.mxu0 0.0
        %2236 = vmatprep.subr.mxu0 0.0
        %2237 = vmatpush1.msra.mxu0 0.0
        %2238 = vmatprep.subr.mxu0 0.0
        %2239 = vmatpush1.msra.mxu0 0.0
        %2240 = vmatprep.subr.mxu0 0.0
        %2241 = vmatpush1.msra.mxu0 0.0
        %2242 = vmatprep.subr.mxu0 0.0
        %2243 = vmatpush1.msra.mxu0 0.0
        %2244 = vmatprep.subr.mxu0 0.0
        %2245 = vmatpush1.msra.mxu0 0.0
        %2246 = vmatprep.subr.mxu0 0.0
        %2247 = vmatpush1.msra.mxu0 0.0
        %2248 = vmatprep.subr.mxu0 0.0
        %2249 = vmatpush1.msra.mxu0 0.0
        %2250 = vmatprep.subr.mxu0 0.0
        %2251 = vmatpush1.msra.mxu0 0.0
        %2252 = vmatprep.subr.mxu0 0.0
        %2253 = vmatpush1.msra.mxu0 0.0
        %2254 = vmatprep.subr.mxu0 0.0
        %2255 = vmatpush1.msra.mxu0 0.0
        %2256 = vmatprep.subr.mxu0 0.0
        %2257 = vmatpush1.msra.mxu0 0.0
        %2258 = vmatprep.mubr.f32.mxu0 0.0
        %2259 = vmatmul.mubr.f32.gmra.mrb[0].mxu0 %v2189
        %v2260 = vpop.f32.mrb[0].mxu0
        %v2261 = vadd.f32 0.0, %v2260
        %v2262 = vpop.f32.mrb[0].mxu0
        %2263 = vdwg.mxu0
        %v2264 = vadd.f32 %v2021, %v2261
        %v2265 = vld [vmem:[%s3] sm:$0x1]
        %v2267 = vlaneseq
        %v2268 = vshrl.u32 %v2267, 7
        %v2269 = vsub.s32 0, %v2268
        %v2270 = vrot.slane %v2265, %v2269
        %v2272 = vadd.f32 %v2264, %v2270
        %2273 = vst.msk [vmem:[%s241] sm:$0xff] %vm247, %v2272
        %s2274 = sand.u32 %s119, 1
        %s2275 = scalar_lea.sflag [#allocation4], %s2274
        %s2276 = sand.u32 %s119, 1
        %s2277 = smul.addr %s2276, 8
        %s2278 = scalar_lea.vmem [#allocation8], %s2277
        // Predicated region
        $region49: #{tpu_custom_call.1} parent=35 // pred_check
          %p2279 = pneg %p129
        $region50: #{tpu_custom_call.1} parent=35 // pred_check_branch
          %2281 = sbr.rel (%p2279) target = $region52
        $region51: #{tpu_custom_call.1} parent=35 // pred_region
          %s2283 = ssub.s32 128, 128
          %2284 = vsyncadd %s2275, %s2283
          %s2285 = smul.addr %s22, 128
          %s2286 = scalar_lea.hbm %s4, %s2285
          %s2288 = sshll.u32 %s2278, 4
          %s2289 = int_to_ptr.vmem [resolvable:$true] %s2288
          %2291 = dma.vmem_to_hbm [thread:$0]  %s2289, 128, %s2286, %s2275
        $region52: #{tpu_custom_call.1} parent=35 // pred_fallthru
          _
      $region36: #{tpu_custom_call.1} parent=5 // pred_fallthru
        _
      %p2292 = scmp.le.s32.totalorder 2, %s17
      // Predicated region
      $region53: #{tpu_custom_call.1} parent=5 // pred_check
        %p2293 = pneg %p2292
      $region54: #{tpu_custom_call.1} parent=5 // pred_check_branch
        %2295 = sbr.rel (%p2293) target = $region56
      $region55: #{tpu_custom_call.1} parent=5 // pred_region
        %s2296 = ssub.s32 %s17, 2
        // Predicated region
        $region57: #{tpu_custom_call.1} parent=55 // pred_check
          %p2297 = pneg %p135
        $region58: #{tpu_custom_call.1} parent=55 // pred_check_branch
          %2299 = sbr.rel (%p2297) target = $region60
        $region59: #{tpu_custom_call.1} parent=55 // pred_region
          %s2300 = sand.u32 %s120, 1
          %s2301 = scalar_lea.sflag [#allocation4], %s2300
          %s2302 = sand.u32 %s120, 1
          %s2303 = smul.addr %s2302, 8
          %s2304 = scalar_lea.vmem [#allocation8], %s2303
          %2305 = dma.done %s2301, 128
        $region60: #{tpu_custom_call.1} parent=55 // pred_fallthru
          _
      $region56: #{tpu_custom_call.1} parent=5 // pred_fallthru
        _
    $region6: #{tpu_custom_call.1} parent=1 // loop_footer
      %s21 = sadd.s32 1, %s17
    $region7: #{tpu_custom_call.1} parent=1 // loop_footer_branch
      %16 = sbr.rel target = $region3
    $region8: #{tpu_custom_call.1} parent=1 // loop_exit
      _
    %2306 = vsyncpa [#allocation3], 1
    %s2307 = scalar_lea.sflag [#allocation3], 1
    %2308 = vsyncpa %s2307, 1
    %2309 = vsyncpa [#allocation6], 1
    %2310 = vsyncpa [#allocation4], 1
    %s2311 = scalar_lea.sflag [#allocation4], 1
    %2312 = vsyncpa %s2311, 1

</llo_original>
